<compile_context>
chip_gen: v7x
topology: tpu7x:2x2x1
jax: 0.10.0
libtpu: 0.0.40
codegen_flags: <defaults>
</compile_context>

<pallas_src>
import functools

import numpy as np
import jax
import jax.numpy as jnp
from jax.experimental import pallas as pl
from jax.experimental.pallas import tpu as pltpu


# ---------------------------------------------------------------------------
# Fused Pallas kernel: conv1 + ReLU -> MultiMaxPool2d(2,2) -> conv2 + ReLU
# ---------------------------------------------------------------------------

def _fdfe_fused_kernel(x_ref, w1_ref, b1_ref, mask1_ref, sel1_ref,
                       w2_ref, b2_ref, sel2_ref, o_ref,
                       *, p1, n1, lm, p2, n2):
    """Whole FDFE forward for ONE image; feature maps never leave VMEM.

    x_ref:     (1, Cp, Lp1)  f32  zero-padded image, channel-major, spatial
                                  flattened with row pitch p1 = W + 2
    w1_ref:    (C1, 9*Cp)    bf16 conv1 weights, K = (tap, cin)
    b1_ref:    (C1, 1)       f32
    mask1_ref: (1, n1)       f32  1.0 on real conv1 wide positions, 0 on the
                                  wrap-around columns / out-of-image tail
    sel1_ref:  (lm, 4*blk2)  bf16 0/1 pool decimation + zero-pad scatter
    w2_ref:    (C2, 9*C1)    bf16
    b2_ref:    (C2, 1)       f32
    sel2_ref:  (n2, 4*ho*wo) f32  0/1 wide-row -> lane-dense compaction
    o_ref:     (1, C2, 4*ho*wo) f32
    """
    x = x_ref[0]                                             # (Cp, Lp1) f32

    # ---- conv1: fused im2col, one K = 9*Cp matmul, spatial on lanes -------
    patch1 = jnp.concatenate(
        [x[:, dy * p1 + dx: dy * p1 + dx + n1]
         for dy in range(3) for dx in range(3)], axis=0)     # (9*Cp, n1) f32
    y1 = jnp.dot(w1_ref[...], patch1.astype(jnp.bfloat16),
                 preferred_element_type=jnp.float32)         # (C1, n1) f32
    # bias + ReLU; mask zeroes wide-row wrap-around columns and the tail rows
    # so they act as the pool's bottom/right zero padding.
    f1 = jnp.maximum(y1 + b1_ref[...], 0.0) * mask1_ref[...]

    # ---- MultiMaxPool2d(2,2) at all 4 offsets ------------------------------
    # 2x2 window max at every anchor = max of 4 lane shifts (VPU), then one
    # exact 0/1 selection matmul decimates all 4 offsets and scatters them
    # into zero-padded per-offset maps already laid out for conv2's taps.
    m = jnp.maximum(
        jnp.maximum(f1[:, 0:lm],        f1[:, 1:lm + 1]),
        jnp.maximum(f1[:, p1:p1 + lm],  f1[:, p1 + 1:p1 + lm + 1]))
    pp = jnp.dot(m.astype(jnp.bfloat16), sel1_ref[...],
                 preferred_element_type=jnp.float32)         # (C1, 4*blk2)

    # ---- conv2 on all 4 offset images in one matmul ------------------------
    patch2 = jnp.concatenate(
        [pp[:, dy * p2 + dx: dy * p2 + dx + n2]
         for dy in range(3) for dx in range(3)], axis=0)     # (9*C1, n2) f32
    y2 = jnp.dot(w2_ref[...], patch2.astype(jnp.bfloat16),
                 preferred_element_type=jnp.float32)         # (C2, n2) f32
    # Compact the wide rows into a lane-dense (C2, 4*ho*wo) block, then
    # bias + ReLU and one unmasked 256-lane store.
    out = jnp.dot(y2, sel2_ref[...], preferred_element_type=jnp.float32)
    o_ref[0] = jnp.maximum(out + b2_ref[...], 0.0)


# ---------------------------------------------------------------------------
# Static constants (masks / selection matrices) for a given image size
# ---------------------------------------------------------------------------

@functools.lru_cache(maxsize=None)
def _fdfe_constants(H, W):
    assert H % 2 == 0 and W % 2 == 0, (H, W)
    P1 = W + 2                           # conv1 wide-row pitch
    Lm = H * P1                          # window-max positions
    N1 = Lm + P1 + 2                     # conv1 wide positions (incl. zero tail)
    Hp1 = -(-(N1 + 2 * P1 + 2) // P1)    # padded input rows (1 top + rest bottom)
    ho, wo = H // 2, W // 2
    P2 = wo + 2                          # conv2 wide-row pitch
    blk2 = (ho + 3) * P2                 # one zero-padded pooled map, flattened
    N2 = 3 * blk2 + ho * P2              # conv2 wide positions across 4 offsets

    # mask1: keep only real-image conv1 outputs (drop wrap-around cols / tail).
    mask1 = np.zeros((1, N1), np.float32)
    for p in range(Lm):
        if p % P1 < W:
            mask1[0, p] = 1.0

    # sel1[p, q] = 1  <=>  window-max position p = (2*yo+i)*P1 + (2*xo+j)
    # is pooled pixel (yo, xo) of offset k = 2*i + j, scattered into that
    # offset's (ho+3, P2) zero-padded map at (yo+1, xo+1).
    sel1 = np.zeros((Lm, 4 * blk2), np.float32)
    for k in range(4):
        i, j = k // 2, k % 2
        for yo in range(ho):
            for xo in range(wo):
                p = (2 * yo + i) * P1 + (2 * xo + j)
                q = k * blk2 + (yo + 1) * P2 + (xo + 1)
                sel1[p, q] = 1.0

    # sel2 compacts conv2's wide rows (per-offset stride blk2, row pitch P2)
    # into the lane-dense (offset, yo, xo) output ordering.
    sel2 = np.zeros((N2, 4 * ho * wo), np.float32)
    for k in range(4):
        for yo in range(ho):
            for xo in range(wo):
                t = k * blk2 + yo * P2 + xo
                q = (k * ho + yo) * wo + xo
                sel2[t, q] = 1.0

    return dict(P1=P1, Lm=Lm, N1=N1, Hp1=Hp1, ho=ho, wo=wo, P2=P2,
                blk2=blk2, N2=N2,
                mask1=jnp.asarray(mask1),
                sel1=jnp.asarray(sel1, jnp.bfloat16),
                sel2=jnp.asarray(sel2, jnp.float32))


# ---------------------------------------------------------------------------
# Forward wrapper (only input prep and the final NCHW reshape stay in XLA)
# ---------------------------------------------------------------------------

def fdfe_net_forward(x_nchw, params):
    """FDFENet.forward: conv1 -> ReLU -> MultiMaxPool2d(2,2) -> conv2 -> ReLU,
    one fused pallas_call with grid = batch ('parallel' for megacore / v7x)."""
    B, Cin, H, W = x_nchw.shape
    w1_hwio, b1 = params["w1"], params["b1"]
    w2_hwio, b2 = params["w2"], params["b2"]
    C1, C2 = w1_hwio.shape[-1], w2_hwio.shape[-1]

    c = _fdfe_constants(H, W)
    P1, N1, Lm, Hp1 = c["P1"], c["N1"], c["Lm"], c["Hp1"]
    P2, blk2, N2 = c["P2"], c["blk2"], c["N2"]
    ho, wo = c["ho"], c["wo"]
    out_lanes = 4 * ho * wo

    # Pad channels up to a full 8-sublane group so the in-kernel K-stacking
    # concatenates tile-aligned pieces; pad/flatten to channel-major wide rows.
    Cp = max(8, -(-Cin // 8) * 8)
    xp = jnp.pad(x_nchw, ((0, 0), (0, Cp - Cin), (1, Hp1 - H - 1), (1, 1)))
    xflat = xp.reshape(B, Cp, Hp1 * P1).astype(jnp.float32)

    # Weights as (Cout, 9*Cin) with K ordered (tap, cin); bf16 MXU operands.
    w1p = jnp.pad(w1_hwio, ((0, 0), (0, 0), (0, Cp - Cin), (0, 0)))
    w1mat = jnp.transpose(w1p, (3, 0, 1, 2)).reshape(C1, 9 * Cp)
    w1mat = w1mat.astype(jnp.bfloat16)
    w2mat = jnp.transpose(w2_hwio, (3, 0, 1, 2)).reshape(C2, 9 * C1)
    w2mat = w2mat.astype(jnp.bfloat16)
    b1c = b1.reshape(C1, 1).astype(jnp.float32)
    b2c = b2.reshape(C2, 1).astype(jnp.float32)

    kernel = functools.partial(_fdfe_fused_kernel,
                               p1=P1, n1=N1, lm=Lm, p2=P2, n2=N2)
    out = pl.pallas_call(
        kernel,
        out_shape=jax.ShapeDtypeStruct((B, C2, out_lanes), jnp.float32),
        grid=(B,),
        in_specs=[
            pl.BlockSpec((1, Cp, Hp1 * P1), lambda b: (b, 0, 0)),
            pl.BlockSpec((C1, 9 * Cp), lambda b: (0, 0)),
            pl.BlockSpec((C1, 1), lambda b: (0, 0)),
            pl.BlockSpec((1, N1), lambda b: (0, 0)),
            pl.BlockSpec((Lm, 4 * blk2), lambda b: (0, 0)),
            pl.BlockSpec((C2, 9 * C1), lambda b: (0, 0)),
            pl.BlockSpec((C2, 1), lambda b: (0, 0)),
            pl.BlockSpec((N2, out_lanes), lambda b: (0, 0)),
        ],
        out_specs=pl.BlockSpec((1, C2, out_lanes), lambda b: (b, 0, 0)),
        compiler_params=pltpu.CompilerParams(
            dimension_semantics=("parallel",)),
    )(xflat, w1mat, b1c, c["mask1"], c["sel1"], w2mat, b2c, c["sel2"])

    # (B, C2, 4*ho*wo) -> offset-major concat along batch, NCHW (torch.cat).
    out = out.reshape(B, C2, 4, ho, wo)
    return jnp.transpose(out, (2, 0, 1, 3, 4)).reshape(4 * B, C2, ho, wo)


# ---------------------------------------------------------------------------
# Deterministic parameter init (synthetic; no checkpoint load)
# ---------------------------------------------------------------------------

def init_params(key):
    k1, k2, k3, k4 = jax.random.split(key, 4)
    # PyTorch conv weight layout is (Cout, Cin, kh, kw); convert to HWIO.
    w1_oihw = jax.random.normal(k1, (8, 4, 3, 3), jnp.float32) * 0.1
    b1 = jax.random.normal(k2, (8,), jnp.float32) * 0.1
    w2_oihw = jax.random.normal(k3, (8, 8, 3, 3), jnp.float32) * 0.1
    b2 = jax.random.normal(k4, (8,), jnp.float32) * 0.1
    return dict(
        w1=jnp.transpose(w1_oihw, (2, 3, 1, 0)),
        b1=b1,
        w2=jnp.transpose(w2_oihw, (2, 3, 1, 0)),
        b2=b2,
    )


# ---------------------------------------------------------------------------
# Pure-JAX reference (bf16 matmul operands / f32 accumulation, like the kernel)
# ---------------------------------------------------------------------------

def _reference_forward(x_nchw, params):
    x = jnp.transpose(x_nchw, (0, 2, 3, 1))

    def conv(xx, w_hwio, b):
        y = jax.lax.conv_general_dilated(
            xx.astype(jnp.bfloat16), w_hwio.astype(jnp.bfloat16),
            window_strides=(1, 1), padding="SAME",
            dimension_numbers=("NHWC", "HWIO", "NHWC"),
            preferred_element_type=jnp.float32)
        return jnp.maximum(y + b, 0.0)

    def pool(xx):
        n, h, w, ch = xx.shape
        xp = jnp.pad(xx, ((0, 0), (0, 1), (0, 1), (0, 0)))
        outs = []
        for i in range(2):
            for j in range(2):
                v = xp[:, i:i + h, j:j + w, :]
                v = v.reshape(n, h // 2, 2, w // 2, 2, ch).max(axis=(2, 4))
                outs.append(v)
        return jnp.concatenate(outs, axis=0)

    x = conv(x, params["w1"], params["b1"])
    x = pool(x)
    x = conv(x, params["w2"], params["b2"])
    return jnp.transpose(x, (0, 3, 1, 2))


if __name__ == "__main__":
    key = jax.random.PRNGKey(0)
    pkey, xkey = jax.random.split(key)
    params = init_params(pkey)
    x = jax.random.normal(xkey, (2, 4, 16, 16), jnp.float32)   # NCHW, like PyTorch

    fwd = jax.jit(fdfe_net_forward)
    out = jax.block_until_ready(fwd(x, params))

    ref = _reference_forward(x, params)
    assert out.shape == (8, 8, 8, 8), out.shape                # batch 2*4, C=8, 8x8
    # Tolerance covers bf16 MXU operands (f32 accumulation) vs the XLA conv.
    assert jnp.allclose(out, ref, atol=5e-3, rtol=5e-3), float(
        jnp.max(jnp.abs(out - ref)))
    print("KERNEL_OK")
</pallas_src>

<mosaic_0001>
module attributes {stable_mosaic.version = 11 : i64} {
  func.func @_fdfe_fused_kernel(%arg0: i32, %arg1: memref<1x8x360xf32, #tpu.memory_space<vmem>>, %arg2: memref<8x72xbf16, #tpu.memory_space<vmem>>, %arg3: memref<8x1xf32, #tpu.memory_space<vmem>>, %arg4: memref<1x308xf32, #tpu.memory_space<vmem>>, %arg5: memref<288x440xbf16, #tpu.memory_space<vmem>>, %arg6: memref<8x72xbf16, #tpu.memory_space<vmem>>, %arg7: memref<8x1xf32, #tpu.memory_space<vmem>>, %arg8: memref<410x256xf32, #tpu.memory_space<vmem>>, %arg9: memref<1x8x256xf32, #tpu.memory_space<vmem>>) attributes {dimension_semantics = [#tpu.dimension_semantics<parallel>], iteration_bounds = array<i64: 2>, scalar_prefetch = 0 : i64, scratch_operands = 0 : i64, tpu.core_type = #tpu.core_type<tc>, window_params = [{transform_indices = @transform_0, window_bounds = array<i64: 1, 8, 360>}, {pipeline_mode = #tpu.pipeline_mode<synchronous>, transform_indices = @transform_1, window_bounds = array<i64: 8, 72>}, {pipeline_mode = #tpu.pipeline_mode<synchronous>, transform_indices = @transform_2, window_bounds = array<i64: 8, 1>}, {pipeline_mode = #tpu.pipeline_mode<synchronous>, transform_indices = @transform_3, window_bounds = array<i64: 1, 308>}, {pipeline_mode = #tpu.pipeline_mode<synchronous>, transform_indices = @transform_4, window_bounds = array<i64: 288, 440>}, {pipeline_mode = #tpu.pipeline_mode<synchronous>, transform_indices = @transform_5, window_bounds = array<i64: 8, 72>}, {pipeline_mode = #tpu.pipeline_mode<synchronous>, transform_indices = @transform_6, window_bounds = array<i64: 8, 1>}, {pipeline_mode = #tpu.pipeline_mode<synchronous>, transform_indices = @transform_7, window_bounds = array<i64: 410, 256>}, {transform_indices = @transform_8, window_bounds = array<i64: 1, 8, 256>}]} {
    %c0 = arith.constant 0 : index
    %c0_0 = arith.constant 0 : index
    %c0_1 = arith.constant 0 : index
    %0 = vector.load %arg1[%c0, %c0_0, %c0_1] : memref<1x8x360xf32, #tpu.memory_space<vmem>>, vector<1x8x360xf32>
    %1 = vector.shape_cast %0 : vector<1x8x360xf32> to vector<8x360xf32>
    %2 = vector.extract_strided_slice %1 {offsets = [0, 0], sizes = [8, 308], strides = [1, 1]} : vector<8x360xf32> to vector<8x308xf32>
    %3 = vector.extract_strided_slice %1 {offsets = [0, 1], sizes = [8, 308], strides = [1, 1]} : vector<8x360xf32> to vector<8x308xf32>
    %4 = vector.extract_strided_slice %1 {offsets = [0, 2], sizes = [8, 308], strides = [1, 1]} : vector<8x360xf32> to vector<8x308xf32>
    %5 = vector.extract_strided_slice %1 {offsets = [0, 18], sizes = [8, 308], strides = [1, 1]} : vector<8x360xf32> to vector<8x308xf32>
    %6 = vector.extract_strided_slice %1 {offsets = [0, 19], sizes = [8, 308], strides = [1, 1]} : vector<8x360xf32> to vector<8x308xf32>
    %7 = vector.extract_strided_slice %1 {offsets = [0, 20], sizes = [8, 308], strides = [1, 1]} : vector<8x360xf32> to vector<8x308xf32>
    %8 = vector.extract_strided_slice %1 {offsets = [0, 36], sizes = [8, 308], strides = [1, 1]} : vector<8x360xf32> to vector<8x308xf32>
    %9 = vector.extract_strided_slice %1 {offsets = [0, 37], sizes = [8, 308], strides = [1, 1]} : vector<8x360xf32> to vector<8x308xf32>
    %10 = vector.extract_strided_slice %1 {offsets = [0, 38], sizes = [8, 308], strides = [1, 1]} : vector<8x360xf32> to vector<8x308xf32>
    %11 = tpu.concatenate %2, %3, %4, %5, %6, %7, %8, %9, %10 in 0 : vector<8x308xf32>, vector<8x308xf32>, vector<8x308xf32>, vector<8x308xf32>, vector<8x308xf32>, vector<8x308xf32>, vector<8x308xf32>, vector<8x308xf32>, vector<8x308xf32> -> vector<72x308xf32>
    %c0_2 = arith.constant 0 : index
    %c0_3 = arith.constant 0 : index
    %12 = vector.load %arg2[%c0_2, %c0_3] : memref<8x72xbf16, #tpu.memory_space<vmem>>, vector<8x72xbf16>
    %13 = arith.truncf %11 : vector<72x308xf32> to vector<72x308xbf16>
    %cst = arith.constant dense<0.000000e+00> : vector<8x308xf32>
    %14 = tpu.matmul %12, %13, %cst {dimension_numbers = #tpu.dot_dimension_numbers<[1], [0], [0], [1], [0, 0, 1, 1], [], []>} : vector<8x72xbf16>, vector<72x308xbf16>, vector<8x308xf32> -> vector<8x308xf32>
    %c0_4 = arith.constant 0 : index
    %c0_5 = arith.constant 0 : index
    %15 = vector.load %arg3[%c0_4, %c0_5] : memref<8x1xf32, #tpu.memory_space<vmem>>, vector<8x1xf32>
    %16 = vector.broadcast %15 : vector<8x1xf32> to vector<8x308xf32>
    %17 = arith.addf %14, %16 : vector<8x308xf32>
    %cst_6 = arith.constant 0.000000e+00 : f32
    %18 = vector.broadcast %cst_6 : f32 to vector<8x308xf32>
    %19 = arith.maximumf %17, %18 : vector<8x308xf32>
    %c0_7 = arith.constant 0 : index
    %c0_8 = arith.constant 0 : index
    %20 = vector.load %arg4[%c0_7, %c0_8] : memref<1x308xf32, #tpu.memory_space<vmem>>, vector<1x308xf32>
    %21 = vector.broadcast %20 : vector<1x308xf32> to vector<8x308xf32>
    %22 = arith.mulf %19, %21 : vector<8x308xf32>
    %23 = vector.extract_strided_slice %22 {offsets = [0, 0], sizes = [8, 288], strides = [1, 1]} : vector<8x308xf32> to vector<8x288xf32>
    %24 = vector.extract_strided_slice %22 {offsets = [0, 1], sizes = [8, 288], strides = [1, 1]} : vector<8x308xf32> to vector<8x288xf32>
    %25 = arith.maximumf %23, %24 : vector<8x288xf32>
    %26 = vector.extract_strided_slice %22 {offsets = [0, 18], sizes = [8, 288], strides = [1, 1]} : vector<8x308xf32> to vector<8x288xf32>
    %27 = vector.extract_strided_slice %22 {offsets = [0, 19], sizes = [8, 288], strides = [1, 1]} : vector<8x308xf32> to vector<8x288xf32>
    %28 = arith.maximumf %26, %27 : vector<8x288xf32>
    %29 = arith.maximumf %25, %28 : vector<8x288xf32>
    %30 = arith.truncf %29 : vector<8x288xf32> to vector<8x288xbf16>
    %c0_9 = arith.constant 0 : index
    %c0_10 = arith.constant 0 : index
    %31 = vector.load %arg5[%c0_9, %c0_10] : memref<288x440xbf16, #tpu.memory_space<vmem>>, vector<288x440xbf16>
    %cst_11 = arith.constant dense<0.000000e+00> : vector<8x440xf32>
    %32 = tpu.matmul %30, %31, %cst_11 {dimension_numbers = #tpu.dot_dimension_numbers<[1], [0], [0], [1], [0, 0, 1, 1], [], []>} : vector<8x288xbf16>, vector<288x440xbf16>, vector<8x440xf32> -> vector<8x440xf32>
    %33 = vector.extract_strided_slice %32 {offsets = [0, 0], sizes = [8, 410], strides = [1, 1]} : vector<8x440xf32> to vector<8x410xf32>
    %34 = vector.extract_strided_slice %32 {offsets = [0, 1], sizes = [8, 410], strides = [1, 1]} : vector<8x440xf32> to vector<8x410xf32>
    %35 = vector.extract_strided_slice %32 {offsets = [0, 2], sizes = [8, 410], strides = [1, 1]} : vector<8x440xf32> to vector<8x410xf32>
    %36 = vector.extract_strided_slice %32 {offsets = [0, 10], sizes = [8, 410], strides = [1, 1]} : vector<8x440xf32> to vector<8x410xf32>
    %37 = vector.extract_strided_slice %32 {offsets = [0, 11], sizes = [8, 410], strides = [1, 1]} : vector<8x440xf32> to vector<8x410xf32>
    %38 = vector.extract_strided_slice %32 {offsets = [0, 12], sizes = [8, 410], strides = [1, 1]} : vector<8x440xf32> to vector<8x410xf32>
    %39 = vector.extract_strided_slice %32 {offsets = [0, 20], sizes = [8, 410], strides = [1, 1]} : vector<8x440xf32> to vector<8x410xf32>
    %40 = vector.extract_strided_slice %32 {offsets = [0, 21], sizes = [8, 410], strides = [1, 1]} : vector<8x440xf32> to vector<8x410xf32>
    %41 = vector.extract_strided_slice %32 {offsets = [0, 22], sizes = [8, 410], strides = [1, 1]} : vector<8x440xf32> to vector<8x410xf32>
    %42 = tpu.concatenate %33, %34, %35, %36, %37, %38, %39, %40, %41 in 0 : vector<8x410xf32>, vector<8x410xf32>, vector<8x410xf32>, vector<8x410xf32>, vector<8x410xf32>, vector<8x410xf32>, vector<8x410xf32>, vector<8x410xf32>, vector<8x410xf32> -> vector<72x410xf32>
    %c0_12 = arith.constant 0 : index
    %c0_13 = arith.constant 0 : index
    %43 = vector.load %arg6[%c0_12, %c0_13] : memref<8x72xbf16, #tpu.memory_space<vmem>>, vector<8x72xbf16>
    %44 = arith.truncf %42 : vector<72x410xf32> to vector<72x410xbf16>
    %cst_14 = arith.constant dense<0.000000e+00> : vector<8x410xf32>
    %45 = tpu.matmul %43, %44, %cst_14 {dimension_numbers = #tpu.dot_dimension_numbers<[1], [0], [0], [1], [0, 0, 1, 1], [], []>} : vector<8x72xbf16>, vector<72x410xbf16>, vector<8x410xf32> -> vector<8x410xf32>
    %c0_15 = arith.constant 0 : index
    %c0_16 = arith.constant 0 : index
    %46 = vector.load %arg8[%c0_15, %c0_16] : memref<410x256xf32, #tpu.memory_space<vmem>>, vector<410x256xf32>
    %cst_17 = arith.constant dense<0.000000e+00> : vector<8x256xf32>
    %47 = tpu.matmul %45, %46, %cst_17 {dimension_numbers = #tpu.dot_dimension_numbers<[1], [0], [0], [1], [0, 0, 1, 1], [], []>} : vector<8x410xf32>, vector<410x256xf32>, vector<8x256xf32> -> vector<8x256xf32>
    %c0_18 = arith.constant 0 : index
    %c0_19 = arith.constant 0 : index
    %48 = vector.load %arg7[%c0_18, %c0_19] : memref<8x1xf32, #tpu.memory_space<vmem>>, vector<8x1xf32>
    %49 = vector.broadcast %48 : vector<8x1xf32> to vector<8x256xf32>
    %50 = arith.addf %47, %49 : vector<8x256xf32>
    %cst_20 = arith.constant 0.000000e+00 : f32
    %51 = vector.broadcast %cst_20 : f32 to vector<8x256xf32>
    %52 = arith.maximumf %50, %51 : vector<8x256xf32>
    %c0_21 = arith.constant 0 : index
    %c0_22 = arith.constant 0 : index
    %c0_23 = arith.constant 0 : index
    %53 = vector.load %arg9[%c0_21, %c0_22, %c0_23] : memref<1x8x256xf32, #tpu.memory_space<vmem>>, vector<1x8x256xf32>
    %54 = vector.shape_cast %53 : vector<1x8x256xf32> to vector<8x256xf32>
    %55 = vector.shape_cast %52 : vector<8x256xf32> to vector<1x8x256xf32>
    tpu.vector_store %arg9[%c0_21, %c0_22, %c0_23], %55 {strides = array<i32>} : memref<1x8x256xf32, #tpu.memory_space<vmem>>, vector<1x8x256xf32>,
    return
  }
  func.func @transform_0(%arg0: i32) -> (i32, i32, i32) {
    %c0_i32 = arith.constant 0 : i32
    %c0_i32_0 = arith.constant 0 : i32
    %c0_i32_1 = arith.constant 0 : i32
    return %arg0, %c0_i32, %c0_i32_0 : i32, i32, i32
  }
  func.func @transform_1(%arg0: i32) -> (i32, i32) {
    %c0_i32 = arith.constant 0 : i32
    %c0_i32_0 = arith.constant 0 : i32
    %c0_i32_1 = arith.constant 0 : i32
    return %c0_i32, %c0_i32_0 : i32, i32
  }
  func.func @transform_2(%arg0: i32) -> (i32, i32) {
    %c0_i32 = arith.constant 0 : i32
    %c0_i32_0 = arith.constant 0 : i32
    %c0_i32_1 = arith.constant 0 : i32
    return %c0_i32, %c0_i32_0 : i32, i32
  }
  func.func @transform_3(%arg0: i32) -> (i32, i32) {
    %c0_i32 = arith.constant 0 : i32
    %c0_i32_0 = arith.constant 0 : i32
    %c0_i32_1 = arith.constant 0 : i32
    return %c0_i32, %c0_i32_0 : i32, i32
  }
  func.func @transform_4(%arg0: i32) -> (i32, i32) {
    %c0_i32 = arith.constant 0 : i32
    %c0_i32_0 = arith.constant 0 : i32
    %c0_i32_1 = arith.constant 0 : i32
    return %c0_i32, %c0_i32_0 : i32, i32
  }
  func.func @transform_5(%arg0: i32) -> (i32, i32) {
    %c0_i32 = arith.constant 0 : i32
    %c0_i32_0 = arith.constant 0 : i32
    %c0_i32_1 = arith.constant 0 : i32
    return %c0_i32, %c0_i32_0 : i32, i32
  }
  func.func @transform_6(%arg0: i32) -> (i32, i32) {
    %c0_i32 = arith.constant 0 : i32
    %c0_i32_0 = arith.constant 0 : i32
    %c0_i32_1 = arith.constant 0 : i32
    return %c0_i32, %c0_i32_0 : i32, i32
  }
  func.func @transform_7(%arg0: i32) -> (i32, i32) {
    %c0_i32 = arith.constant 0 : i32
    %c0_i32_0 = arith.constant 0 : i32
    %c0_i32_1 = arith.constant 0 : i32
    return %c0_i32, %c0_i32_0 : i32, i32
  }
  func.func @transform_8(%arg0: i32) -> (i32, i32, i32) {
    %c0_i32 = arith.constant 0 : i32
    %c0_i32_0 = arith.constant 0 : i32
    %c0_i32_1 = arith.constant 0 : i32
    return %arg0, %c0_i32, %c0_i32_0 : i32, i32, i32
  }
}

</mosaic_0001>

<llo_original>
// kernel: fdfe_net_forward.1
$region0: #{fdfe_net_forward.1}
  #allocation0 [shape = 'u32[]', space=smem, size = 0x4, offset = 0x4, fixed_abs, tag = 'smem constant byte address 0x4 - core index']
  #allocation1 [shape = 'u32[144,128]{1,0:T(1,128)}', space=vmem, size = 0x12000, scoped, tag = 'internal scratch']
  %s0 = inlined_call_operand.vmem [shape: f32[2,8,360], index: 0, kind: input, shape index: {}]
  %s1 = inlined_call_operand.vmem [shape: bf16[8,72], index: 1, kind: input, shape index: {}]
  %s2 = inlined_call_operand.vmem [shape: f32[8,1], index: 2, kind: input, shape index: {}]
  %s3 = inlined_call_operand.vmem [shape: f32[1,308], index: 3, kind: input, shape index: {}]
  %s4 = inlined_call_operand.vmem [shape: bf16[288,440], index: 4, kind: input, shape index: {}]
  %s5 = inlined_call_operand.vmem [shape: bf16[8,72], index: 5, kind: input, shape index: {}]
  %s6 = inlined_call_operand.vmem [shape: f32[8,1], index: 6, kind: input, shape index: {}]
  %s7 = inlined_call_operand.vmem [shape: f32[410,256], index: 7, kind: input, shape index: {}]
  %s8 = inlined_call_operand.vmem [shape: f32[2,8,256], index: 8, kind: output, shape index: {}]
  %s9 = sld [smem:[#allocation0]]
  $region65: #{fdfe_net_forward.1} parent=0
    _
  %s11 = ssub.s32 1, %s9
  %s12 = scalar_select 0, %s11, %s9
  loop: start=0, step=1, limit=4
  $region2: #{fdfe_net_forward.1} parent=0 // loop_pre_header
    _
  $region3: #{fdfe_net_forward.1} parent=0 // loop_header
    %s14 = sphi 0, %s18
    %p15 = scmp.ge.s32.totalorder %s14, 4
    %s24 = sphi 0, %s26
    %s27 = sphi 0, %s24
    %s28 = sphi 0, %s27
    %s44 = sphi 0, %s28
    %s48 = sphi 0, %s48
    %s50 = sphi 0, %s48
    %s51 = sphi 0, %s50
    %s65 = sphi 0, %s51
    %s69 = sphi 0, %s69
    %s71 = sphi 0, %s69
    %s72 = sphi 0, %s71
    %s86 = sphi 0, %s72
    %s90 = sphi 0, %s90
    %s92 = sphi 0, %s90
    %s93 = sphi 0, %s92
    %s107 = sphi 0, %s93
    %s111 = sphi 0, %s111
    %s113 = sphi 0, %s111
    %s114 = sphi 0, %s113
    %s128 = sphi 0, %s114
    %s132 = sphi 0, %s132
    %s134 = sphi 0, %s132
    %s135 = sphi 0, %s134
    %s149 = sphi 0, %s135
    %s153 = sphi 0, %s153
    %s155 = sphi 0, %s153
    %s156 = sphi 0, %s155
    %s170 = sphi 0, %s156
    %s174 = sphi 0, %s174
    %s176 = sphi 0, %s174
    %s177 = sphi 0, %s176
    %s191 = sphi 0, %s177
    %s197 = sphi 0, %s199
    %s200 = sphi 0, %s197
    %s201 = sphi 0, %s200
    %s217 = sphi 0, %s201
  $region4: #{fdfe_net_forward.1} parent=0 // loop_header_branch
    %17 = sbr.rel (%p15) target = $region8
  $region5: #{fdfe_net_forward.1} parent=0 // loop_body
    %s19 = ssub.s32 %s14, 1
    %s20 = ssub.s32 %s14, 2
    %s21 = sadd.s32 %s14, 1
    %s22 = ssub.s32 %s14, %s21
    %p23 = scmp.eq.s32.totalorder %s22, 0
    %s25 = sadd.s32 %s24, 1
    %s26 = scalar_select %p23, %s24, %s25
    %p29 = pneg %p23
    %p30 = scmp.eq.s32.totalorder %s14, 1
    %p31 = por %p29, %p30
    %p32 = scmp.ne.s32.totalorder %s24, %s27
    %p33 = scmp.eq.s32.totalorder %s14, 0
    %p34 = por %p32, %p33
    %p35 = scmp.ne.s32.totalorder %s24, %s27
    %p36 = scmp.eq.s32.totalorder %s19, 1
    %p37 = por %p35, %p36
    %p38 = scmp.ne.s32.totalorder %s27, %s28
    %p39 = scmp.eq.s32.totalorder %s19, 0
    %p40 = por %p38, %p39
    %p41 = scmp.ne.s32.totalorder %s27, %s28
    %p42 = scmp.eq.s32.totalorder %s20, 1
    %p43 = por %p41, %p42
    %p45 = scmp.ne.s32.totalorder %s28, %s44
    %p46 = scmp.eq.s32.totalorder %s20, 0
    %p47 = por %p45, %p46
    %s49 = sadd.s32 %s48, 1
    %p52 = scmp.eq.s32.totalorder %s14, 1
    %p53 = scmp.ne.s32.totalorder %s48, %s50
    %p54 = scmp.eq.s32.totalorder %s14, 0
    %p55 = por %p53, %p54
    %p56 = scmp.ne.s32.totalorder %s48, %s50
    %p57 = scmp.eq.s32.totalorder %s19, 1
    %p58 = por %p56, %p57
    %p59 = scmp.ne.s32.totalorder %s50, %s51
    %p60 = scmp.eq.s32.totalorder %s19, 0
    %p61 = por %p59, %p60
    %p62 = scmp.ne.s32.totalorder %s50, %s51
    %p63 = scmp.eq.s32.totalorder %s20, 1
    %p64 = por %p62, %p63
    %p66 = scmp.ne.s32.totalorder %s51, %s65
    %p67 = scmp.eq.s32.totalorder %s20, 0
    %p68 = por %p66, %p67
    %s70 = sadd.s32 %s69, 1
    %p73 = scmp.eq.s32.totalorder %s14, 1
    %p74 = scmp.ne.s32.totalorder %s69, %s71
    %p75 = scmp.eq.s32.totalorder %s14, 0
    %p76 = por %p74, %p75
    %p77 = scmp.ne.s32.totalorder %s69, %s71
    %p78 = scmp.eq.s32.totalorder %s19, 1
    %p79 = por %p77, %p78
    %p80 = scmp.ne.s32.totalorder %s71, %s72
    %p81 = scmp.eq.s32.totalorder %s19, 0
    %p82 = por %p80, %p81
    %p83 = scmp.ne.s32.totalorder %s71, %s72
    %p84 = scmp.eq.s32.totalorder %s20, 1
    %p85 = por %p83, %p84
    %p87 = scmp.ne.s32.totalorder %s72, %s86
    %p88 = scmp.eq.s32.totalorder %s20, 0
    %p89 = por %p87, %p88
    %s91 = sadd.s32 %s90, 1
    %p94 = scmp.eq.s32.totalorder %s14, 1
    %p95 = scmp.ne.s32.totalorder %s90, %s92
    %p96 = scmp.eq.s32.totalorder %s14, 0
    %p97 = por %p95, %p96
    %p98 = scmp.ne.s32.totalorder %s90, %s92
    %p99 = scmp.eq.s32.totalorder %s19, 1
    %p100 = por %p98, %p99
    %p101 = scmp.ne.s32.totalorder %s92, %s93
    %p102 = scmp.eq.s32.totalorder %s19, 0
    %p103 = por %p101, %p102
    %p104 = scmp.ne.s32.totalorder %s92, %s93
    %p105 = scmp.eq.s32.totalorder %s20, 1
    %p106 = por %p104, %p105
    %p108 = scmp.ne.s32.totalorder %s93, %s107
    %p109 = scmp.eq.s32.totalorder %s20, 0
    %p110 = por %p108, %p109
    %s112 = sadd.s32 %s111, 1
    %p115 = scmp.eq.s32.totalorder %s14, 1
    %p116 = scmp.ne.s32.totalorder %s111, %s113
    %p117 = scmp.eq.s32.totalorder %s14, 0
    %p118 = por %p116, %p117
    %p119 = scmp.ne.s32.totalorder %s111, %s113
    %p120 = scmp.eq.s32.totalorder %s19, 1
    %p121 = por %p119, %p120
    %p122 = scmp.ne.s32.totalorder %s113, %s114
    %p123 = scmp.eq.s32.totalorder %s19, 0
    %p124 = por %p122, %p123
    %p125 = scmp.ne.s32.totalorder %s113, %s114
    %p126 = scmp.eq.s32.totalorder %s20, 1
    %p127 = por %p125, %p126
    %p129 = scmp.ne.s32.totalorder %s114, %s128
    %p130 = scmp.eq.s32.totalorder %s20, 0
    %p131 = por %p129, %p130
    %s133 = sadd.s32 %s132, 1
    %p136 = scmp.eq.s32.totalorder %s14, 1
    %p137 = scmp.ne.s32.totalorder %s132, %s134
    %p138 = scmp.eq.s32.totalorder %s14, 0
    %p139 = por %p137, %p138
    %p140 = scmp.ne.s32.totalorder %s132, %s134
    %p141 = scmp.eq.s32.totalorder %s19, 1
    %p142 = por %p140, %p141
    %p143 = scmp.ne.s32.totalorder %s134, %s135
    %p144 = scmp.eq.s32.totalorder %s19, 0
    %p145 = por %p143, %p144
    %p146 = scmp.ne.s32.totalorder %s134, %s135
    %p147 = scmp.eq.s32.totalorder %s20, 1
    %p148 = por %p146, %p147
    %p150 = scmp.ne.s32.totalorder %s135, %s149
    %p151 = scmp.eq.s32.totalorder %s20, 0
    %p152 = por %p150, %p151
    %s154 = sadd.s32 %s153, 1
    %p157 = scmp.eq.s32.totalorder %s14, 1
    %p158 = scmp.ne.s32.totalorder %s153, %s155
    %p159 = scmp.eq.s32.totalorder %s14, 0
    %p160 = por %p158, %p159
    %p161 = scmp.ne.s32.totalorder %s153, %s155
    %p162 = scmp.eq.s32.totalorder %s19, 1
    %p163 = por %p161, %p162
    %p164 = scmp.ne.s32.totalorder %s155, %s156
    %p165 = scmp.eq.s32.totalorder %s19, 0
    %p166 = por %p164, %p165
    %p167 = scmp.ne.s32.totalorder %s155, %s156
    %p168 = scmp.eq.s32.totalorder %s20, 1
    %p169 = por %p167, %p168
    %p171 = scmp.ne.s32.totalorder %s156, %s170
    %p172 = scmp.eq.s32.totalorder %s20, 0
    %p173 = por %p171, %p172
    %s175 = sadd.s32 %s174, 1
    %p178 = scmp.eq.s32.totalorder %s14, 1
    %p179 = scmp.ne.s32.totalorder %s174, %s176
    %p180 = scmp.eq.s32.totalorder %s14, 0
    %p181 = por %p179, %p180
    %p182 = scmp.ne.s32.totalorder %s174, %s176
    %p183 = scmp.eq.s32.totalorder %s19, 1
    %p184 = por %p182, %p183
    %p185 = scmp.ne.s32.totalorder %s176, %s177
    %p186 = scmp.eq.s32.totalorder %s19, 0
    %p187 = por %p185, %p186
    %p188 = scmp.ne.s32.totalorder %s176, %s177
    %p189 = scmp.eq.s32.totalorder %s20, 1
    %p190 = por %p188, %p189
    %p192 = scmp.ne.s32.totalorder %s177, %s191
    %p193 = scmp.eq.s32.totalorder %s20, 0
    %p194 = por %p192, %p193
    %s195 = ssub.s32 %s14, %s21
    %p196 = scmp.eq.s32.totalorder %s195, 0
    %s198 = sadd.s32 %s197, 1
    %s199 = scalar_select %p196, %s197, %s198
    %p202 = pneg %p196
    %p203 = scmp.eq.s32.totalorder %s14, 1
    %p204 = por %p202, %p203
    %p205 = scmp.ne.s32.totalorder %s197, %s200
    %p206 = scmp.eq.s32.totalorder %s14, 0
    %p207 = por %p205, %p206
    %p208 = scmp.ne.s32.totalorder %s197, %s200
    %p209 = scmp.eq.s32.totalorder %s19, 1
    %p210 = por %p208, %p209
    %p211 = scmp.ne.s32.totalorder %s200, %s201
    %p212 = scmp.eq.s32.totalorder %s19, 0
    %p213 = por %p211, %p212
    %p214 = scmp.ne.s32.totalorder %s200, %s201
    %p215 = scmp.eq.s32.totalorder %s20, 1
    %p216 = por %p214, %p215
    %p218 = scmp.ne.s32.totalorder %s201, %s217
    %p219 = scmp.eq.s32.totalorder %s20, 0
    %p220 = por %p218, %p219
    %p221 = scmp.le.s32.totalorder 1, %s14
    %p222 = scmp.lt.s32.totalorder %s14, 3
    %p223 = pnand %p221, %p222
    %p224 = pneg %p223
    // Predicated region
    $region9: #{fdfe_net_forward.1} parent=5 // pred_check
      _
    $region10: #{fdfe_net_forward.1} parent=5 // pred_check_branch
      %226 = sbr.rel (%p223) target = $region12
    $region11: #{fdfe_net_forward.1} parent=5 // pred_region
      %s227 = ssub.s32 %s14, 1
      // Predicated region
      $region13: #{fdfe_net_forward.1} parent=11 // pred_check
        %p228 = pneg %p61
      $region14: #{fdfe_net_forward.1} parent=11 // pred_check_branch
        %230 = sbr.rel (%p228) target = $region16
      $region15: #{fdfe_net_forward.1} parent=11 // pred_region
        _
      $region16: #{fdfe_net_forward.1} parent=11 // pred_fallthru
        _
      // Predicated region
      $region17: #{fdfe_net_forward.1} parent=11 // pred_check
        %p231 = pneg %p82
      $region18: #{fdfe_net_forward.1} parent=11 // pred_check_branch
        %233 = sbr.rel (%p231) target = $region20
      $region19: #{fdfe_net_forward.1} parent=11 // pred_region
        _
      $region20: #{fdfe_net_forward.1} parent=11 // pred_fallthru
        _
      // Predicated region
      $region21: #{fdfe_net_forward.1} parent=11 // pred_check
        %p234 = pneg %p103
      $region22: #{fdfe_net_forward.1} parent=11 // pred_check_branch
        %236 = sbr.rel (%p234) target = $region24
      $region23: #{fdfe_net_forward.1} parent=11 // pred_region
        _
      $region24: #{fdfe_net_forward.1} parent=11 // pred_fallthru
        _
      // Predicated region
      $region25: #{fdfe_net_forward.1} parent=11 // pred_check
        %p237 = pneg %p124
      $region26: #{fdfe_net_forward.1} parent=11 // pred_check_branch
        %239 = sbr.rel (%p237) target = $region28
      $region27: #{fdfe_net_forward.1} parent=11 // pred_region
        _
      $region28: #{fdfe_net_forward.1} parent=11 // pred_fallthru
        _
      // Predicated region
      $region29: #{fdfe_net_forward.1} parent=11 // pred_check
        %p240 = pneg %p145
      $region30: #{fdfe_net_forward.1} parent=11 // pred_check_branch
        %242 = sbr.rel (%p240) target = $region32
      $region31: #{fdfe_net_forward.1} parent=11 // pred_region
        _
      $region32: #{fdfe_net_forward.1} parent=11 // pred_fallthru
        _
      // Predicated region
      $region33: #{fdfe_net_forward.1} parent=11 // pred_check
        %p243 = pneg %p166
      $region34: #{fdfe_net_forward.1} parent=11 // pred_check_branch
        %245 = sbr.rel (%p243) target = $region36
      $region35: #{fdfe_net_forward.1} parent=11 // pred_region
        _
      $region36: #{fdfe_net_forward.1} parent=11 // pred_fallthru
        _
      // Predicated region
      $region37: #{fdfe_net_forward.1} parent=11 // pred_check
        %p246 = pneg %p187
      $region38: #{fdfe_net_forward.1} parent=11 // pred_check_branch
        %248 = sbr.rel (%p246) target = $region40
      $region39: #{fdfe_net_forward.1} parent=11 // pred_region
        _
      $region40: #{fdfe_net_forward.1} parent=11 // pred_fallthru
        _
    $region12: #{fdfe_net_forward.1} parent=5 // pred_fallthru
      _
    %p249 = scmp.lt.s32.totalorder %s14, 2
    // Predicated region
    $region41: #{fdfe_net_forward.1} parent=5 // pred_check
      %p250 = pneg %p249
    $region42: #{fdfe_net_forward.1} parent=5 // pred_check_branch
      %252 = sbr.rel (%p250) target = $region44
    $region43: #{fdfe_net_forward.1} parent=5 // pred_region
      // Predicated region
      $region45: #{fdfe_net_forward.1} parent=43 // pred_check
        %p253 = pneg %p34
      $region46: #{fdfe_net_forward.1} parent=43 // pred_check_branch
        %255 = sbr.rel (%p253) target = $region48
      $region47: #{fdfe_net_forward.1} parent=43 // pred_region
        %p256 = scmp.lt.s32.totalorder %s14, 1
        %s257 = scalar_select %p256, %s14, 1
        %s258 = smul.addr %s257, 3
        %s259 = smul.addr %s258, 8
        %s260 = scalar_lea.vmem %s0, %s259
      $region48: #{fdfe_net_forward.1} parent=43 // pred_fallthru
        _
    $region44: #{fdfe_net_forward.1} parent=5 // pred_fallthru
      _
    %p261 = scmp.le.s32.totalorder 1, %s14
    %p262 = scmp.lt.s32.totalorder %s14, 3
    %p263 = pnand %p261, %p262
    %p264 = pneg %p263
    // Predicated region
    $region49: #{fdfe_net_forward.1} parent=5 // pred_check
      _
    $region50: #{fdfe_net_forward.1} parent=5 // pred_check_branch
      %266 = sbr.rel (%p263) target = $region52
    $region51: #{fdfe_net_forward.1} parent=5 // pred_region
      %s267 = ssub.s32 %s14, 1
      %p268 = scmp.lt.s32.totalorder %s19, 1
      %s269 = scalar_select %p268, %s19, 1
      %s270 = smul.addr %s269, 3
      %s271 = smul.addr %s270, 8
      %s272 = scalar_lea.vmem %s0, %s271
      %p273 = pneg %p40
      %p274 = pneg %p37
      %p275 = pneg %p61
      %p276 = pneg %p58
      %p277 = pneg %p82
      %p278 = pneg %p79
      %p279 = pneg %p103
      %p280 = pneg %p100
      %p281 = pneg %p124
      %p282 = pneg %p121
      %p283 = pneg %p145
      %p284 = pneg %p142
      %p285 = pneg %p166
      %p286 = pneg %p163
      %p287 = pneg %p187
      %p288 = pneg %p184
      %p289 = pneg %p213
      %p290 = pneg %p210
      %p291 = scmp.lt.s32.totalorder %s19, 1
      %s292 = scalar_select %p291, %s19, 1
      %s293 = smul.addr %s292, 2
      %s294 = smul.addr %s293, 8
      %s295 = scalar_lea.vmem %s8, %s294
      %p296 = scmp.lt.s32.totalorder %s19, 1
      %s297 = scalar_select %p296, %s19, 1
      %s298 = smul.addr %s297, 3
      %s299 = smul.addr %s298, 8
      %s300 = scalar_lea.vmem %s0, %s299
      %p301 = scmp.lt.s32.totalorder %s19, 1
      %s302 = scalar_select %p301, %s19, 1
      %s303 = smul.addr %s302, 2
      %s304 = smul.addr %s303, 8
      %s305 = scalar_lea.vmem %s8, %s304
      %v307 = vld [vmem:[%s300] sm:$0xff]
      %v308 = vld [vmem:[%s300 + $0x8] sm:$0xff]
      %v309 = vld [vmem:[%s300 + $0x10] sm:$0xff]
      %313 = vrot.lane.b32.xlu0 %v307, 127
      %v314 = vpop.permute.xlu0 %313
      %315 = vrot.lane.b32.xlu0 %v308, 127
      %v316 = vpop.permute.xlu0 %315
      %317 = vrot.lane.b32.xlu0 %v309, 127
      %v318 = vpop.permute.xlu0 %317
      %vm319 = vcmask 1039360
      %v320 = vsel %vm319, %v314, %v316
      %v321 = vsel %vm319, %v316, %v318
      %325 = vrot.lane.b32.xlu0 %v307, 126
      %v326 = vpop.permute.xlu0 %325
      %327 = vrot.lane.b32.xlu0 %v308, 126
      %v328 = vpop.permute.xlu0 %327
      %329 = vrot.lane.b32.xlu0 %v309, 126
      %v330 = vpop.permute.xlu0 %329
      %vm331 = vcmask 1031168
      %v332 = vsel %vm331, %v326, %v328
      %v333 = vsel %vm331, %v328, %v330
      %337 = vrot.lane.b32.xlu0 %v307, 110
      %v338 = vpop.permute.xlu0 %337
      %339 = vrot.lane.b32.xlu0 %v308, 110
      %v340 = vpop.permute.xlu0 %339
      %341 = vrot.lane.b32.xlu0 %v309, 110
      %v342 = vpop.permute.xlu0 %341
      %vm343 = vcmask 900096
      %v344 = vsel %vm343, %v338, %v340
      %v345 = vsel %vm343, %v340, %v342
      %349 = vrot.lane.b32.xlu0 %v307, 109
      %v350 = vpop.permute.xlu0 %349
      %351 = vrot.lane.b32.xlu0 %v308, 109
      %v352 = vpop.permute.xlu0 %351
      %353 = vrot.lane.b32.xlu0 %v309, 109
      %v354 = vpop.permute.xlu0 %353
      %vm355 = vcmask 891904
      %v356 = vsel %vm355, %v350, %v352
      %v357 = vsel %vm355, %v352, %v354
      %361 = vrot.lane.b32.xlu0 %v307, 108
      %v362 = vpop.permute.xlu0 %361
      %363 = vrot.lane.b32.xlu0 %v308, 108
      %v364 = vpop.permute.xlu0 %363
      %365 = vrot.lane.b32.xlu0 %v309, 108
      %v366 = vpop.permute.xlu0 %365
      %vm367 = vcmask 883712
      %v368 = vsel %vm367, %v362, %v364
      %v369 = vsel %vm367, %v364, %v366
      %373 = vrot.lane.b32.xlu0 %v307, 92
      %v374 = vpop.permute.xlu0 %373
      %375 = vrot.lane.b32.xlu0 %v308, 92
      %v376 = vpop.permute.xlu0 %375
      %377 = vrot.lane.b32.xlu0 %v309, 92
      %v378 = vpop.permute.xlu0 %377
      %vm379 = vcmask 752640
      %v380 = vsel %vm379, %v374, %v376
      %v381 = vsel %vm379, %v376, %v378
      %385 = vrot.lane.b32.xlu0 %v307, 91
      %v386 = vpop.permute.xlu0 %385
      %387 = vrot.lane.b32.xlu0 %v308, 91
      %v388 = vpop.permute.xlu0 %387
      %389 = vrot.lane.b32.xlu0 %v309, 91
      %v390 = vpop.permute.xlu0 %389
      %vm391 = vcmask 744448
      %v392 = vsel %vm391, %v386, %v388
      %v393 = vsel %vm391, %v388, %v390
      %397 = vrot.lane.b32.xlu0 %v307, 90
      %v398 = vpop.permute.xlu0 %397
      %399 = vrot.lane.b32.xlu0 %v308, 90
      %v400 = vpop.permute.xlu0 %399
      %401 = vrot.lane.b32.xlu0 %v309, 90
      %v402 = vpop.permute.xlu0 %401
      %vm403 = vcmask 736256
      %v404 = vsel %vm403, %v398, %v400
      %v405 = vsel %vm403, %v400, %v402
      %v409 = vld [vmem:[%s1] sm:$0xf]
      %v410 = vpack.c.bf16 %v320, %v307
      %v411 = vpack.c.bf16 %v321, %v308
      %v412 = vpack.c.bf16 %v318, %v309
      %v413 = vpack.c.bf16 %v344, %v332
      %v414 = vpack.c.bf16 %v345, %v333
      %v415 = vpack.c.bf16 %v342, %v330
      %v416 = vpack.c.bf16 %v368, %v356
      %v417 = vpack.c.bf16 %v369, %v357
      %v418 = vpack.c.bf16 %v366, %v354
      %v419 = vpack.c.bf16 %v392, %v380
      %v420 = vpack.c.bf16 %v393, %v381
      %v421 = vpack.c.bf16 %v390, %v378
      %v422 = vpack.c.bf16 %v404, %v404
      %v423 = vpack.c.bf16 %v405, %v405
      %v424 = vpack.c.bf16 %v402, %v402
      %v425 = vld [vmem:[%s2] sm:$0xff]
      %427 = vset.pattern.permute.xlu0 0
      %428 = vperm.xlu0 %427, %v425
      %v429 = vpop.permute.xlu0 %428
      %vm431 = vcmask 588800
      %v433 = vsel %vm431, %v409, 0
      %vm435 = vcmask 1043456
      %v437 = vsel %vm435, %v422, 0
      %v440 = vsel %vm435, %v423, 0
      %v443 = vsel %vm435, %v424, 0
      %445 = vmatprep.subr.bf16.mxu0 %v411
      %446 = vmatpush1.bf16.msra.mxu0 %v410
      %447 = vmatprep.subr.bf16.mxu0 %v414
      %448 = vmatpush1.bf16.msra.mxu0 %v413
      %449 = vmatprep.subr.bf16.mxu0 %v417
      %450 = vmatpush1.bf16.msra.mxu0 %v416
      %451 = vmatprep.subr.bf16.mxu0 %v420
      %452 = vmatpush1.bf16.msra.mxu0 %v419
      %453 = vmatprep.subr.bf16.mxu0 %v440
      %454 = vmatpush1.bf16.msra.mxu0 %v437
      %455 = vmatprep.subr.bf16.mxu0 0
      %456 = vmatpush1.bf16.msra.mxu0 0
      %457 = vmatprep.subr.bf16.mxu0 0
      %458 = vmatpush1.bf16.msra.mxu0 0
      %459 = vmatprep.subr.bf16.mxu0 0
      %460 = vmatpush1.bf16.msra.mxu0 0
      %461 = vmatprep.subr.bf16.mxu0 0
      %462 = vmatpush1.bf16.msra.mxu0 0
      %463 = vmatprep.subr.bf16.mxu0 0
      %464 = vmatpush1.bf16.msra.mxu0 0
      %465 = vmatprep.subr.bf16.mxu0 0
      %466 = vmatpush1.bf16.msra.mxu0 0
      %467 = vmatprep.subr.bf16.mxu0 0
      %468 = vmatpush1.bf16.msra.mxu0 0
      %469 = vmatprep.subr.bf16.mxu0 0
      %470 = vmatpush1.bf16.msra.mxu0 0
      %471 = vmatprep.subr.bf16.mxu0 0
      %472 = vmatpush1.bf16.msra.mxu0 0
      %473 = vmatprep.subr.bf16.mxu0 0
      %474 = vmatpush1.bf16.msra.mxu0 0
      %475 = vmatprep.subr.bf16.mxu0 0
      %476 = vmatpush1.bf16.msra.mxu0 0
      %477 = vmatprep.mubr.bf16.mxu0 0
      %478 = vmatmul.mubr.bf16.gmra.mrb[0].mxu0 %v433
      %v479 = vpop.f32.mrb[0].mxu0
      %v480 = vadd.f32 %v429, %v479
      %v481 = vpop.f32.mrb[0].mxu0
      %v482 = vadd.f32 %v429, %v481
      %v483 = vpop.f32.mrb[0].mxu0
      %v484 = vpop.f32.mrb[0].mxu0
      %485 = vdwg.mxu0
      %486 = vmatprep.subr.bf16.mxu0 0
      %487 = vmatpush1.bf16.msra.mxu0 %v412
      %488 = vmatprep.subr.bf16.mxu0 0
      %489 = vmatpush1.bf16.msra.mxu0 %v415
      %490 = vmatprep.subr.bf16.mxu0 0
      %491 = vmatpush1.bf16.msra.mxu0 %v418
      %492 = vmatprep.subr.bf16.mxu0 0
      %493 = vmatpush1.bf16.msra.mxu0 %v421
      %494 = vmatprep.subr.bf16.mxu0 0
      %495 = vmatpush1.bf16.msra.mxu0 %v443
      %496 = vmatprep.subr.bf16.mxu0 0
      %497 = vmatpush1.bf16.msra.mxu0 0
      %498 = vmatprep.subr.bf16.mxu0 0
      %499 = vmatpush1.bf16.msra.mxu0 0
      %500 = vmatprep.subr.bf16.mxu0 0
      %501 = vmatpush1.bf16.msra.mxu0 0
      %502 = vmatprep.subr.bf16.mxu0 0
      %503 = vmatpush1.bf16.msra.mxu0 0
      %504 = vmatprep.subr.bf16.mxu0 0
      %505 = vmatpush1.bf16.msra.mxu0 0
      %506 = vmatprep.subr.bf16.mxu0 0
      %507 = vmatpush1.bf16.msra.mxu0 0
      %508 = vmatprep.subr.bf16.mxu0 0
      %509 = vmatpush1.bf16.msra.mxu0 0
      %510 = vmatprep.subr.bf16.mxu0 0
      %511 = vmatpush1.bf16.msra.mxu0 0
      %512 = vmatprep.subr.bf16.mxu0 0
      %513 = vmatpush1.bf16.msra.mxu0 0
      %514 = vmatprep.subr.bf16.mxu0 0
      %515 = vmatpush1.bf16.msra.mxu0 0
      %516 = vmatprep.subr.bf16.mxu0 0
      %517 = vmatpush1.bf16.msra.mxu0 0
      %518 = vmatprep.mubr.bf16.mxu0 0
      %519 = vmatmul.mubr.bf16.gmra.mrb[0].mxu0 %v433
      %v520 = vpop.f32.mrb[0].mxu0
      %v521 = vadd.f32 %v429, %v520
      %v522 = vpop.f32.mrb[0].mxu0
      %v523 = vpop.f32.mrb[0].mxu0
      %v524 = vpop.f32.mrb[0].mxu0
      %525 = vdwg.mxu0
      %v526 = vmax.f32 %v480, 0.0
      %v527 = vmax.f32 %v482, 0.0
      %v528 = vmax.f32 %v521, 0.0
      %v529 = vld [vmem:[%s3] sm:$0x7]
      %v531 = vlaneseq
      %v532 = vshrl.u32 %v531, 7
      %v533 = vsub.s32 0, %v532
      %v534 = vrot.slane %v529, %v533
      %v535 = vlaneseq
      %v536 = vshrl.u32 %v535, 7
      %v537 = vsub.s32 1, %v536
      %v538 = vrot.slane %v529, %v537
      %v539 = vlaneseq
      %v540 = vshrl.u32 %v539, 7
      %v541 = vsub.s32 2, %v540
      %v542 = vrot.slane %v529, %v541
      %v546 = vmul.f32 %v526, %v534
      %v547 = vmul.f32 %v527, %v538
      %v548 = vmul.f32 %v528, %v542
      %552 = vrot.lane.b32.xlu0 %v546, 127
      %v553 = vpop.permute.xlu0 %552
      %554 = vrot.lane.b32.xlu0 %v547, 127
      %v555 = vpop.permute.xlu0 %554
      %556 = vrot.lane.b32.xlu0 %v548, 127
      %v557 = vpop.permute.xlu0 %556
      %v558 = vsel %vm319, %v553, %v555
      %v559 = vsel %vm319, %v555, %v557
      %v563 = vmax.f32 %v546, %v558
      %v564 = vmax.f32 %v547, %v559
      %v565 = vmax.f32 %v548, %v557
      %569 = vrot.lane.b32.xlu0 %v563, 110
      %v570 = vpop.permute.xlu0 %569
      %571 = vrot.lane.b32.xlu0 %v564, 110
      %v572 = vpop.permute.xlu0 %571
      %573 = vrot.lane.b32.xlu0 %v565, 110
      %v574 = vpop.permute.xlu0 %573
      %v575 = vsel %vm343, %v570, %v572
      %v576 = vsel %vm343, %v572, %v574
      %v580 = vmax.f32 %v563, %v575
      %v581 = vmax.f32 %v564, %v576
      %v582 = vmax.f32 %v565, %v574
      %v583 = vpack.c.bf16 %v580, %v580
      %v584 = vpack.c.bf16 %v581, %v581
      %v585 = vpack.c.bf16 %v582, %v582
      %v586 = vld [vmem:[%s4] sm:$0xff]
      %v587 = vld [vmem:[%s4 + $0x8] sm:$0xff]
      %v588 = vld [vmem:[%s4 + $0x10] sm:$0xff]
      %v589 = vld [vmem:[%s4 + $0x18] sm:$0xff]
      %v590 = vld [vmem:[%s4 + $0x20] sm:$0xff]
      %v591 = vld [vmem:[%s4 + $0x28] sm:$0xff]
      %v592 = vld [vmem:[%s4 + $0x30] sm:$0xff]
      %v593 = vld [vmem:[%s4 + $0x38] sm:$0xff]
      %v594 = vld [vmem:[%s4 + $0x40] sm:$0xff]
      %v595 = vld [vmem:[%s4 + $0x48] sm:$0xff]
      %v596 = vld [vmem:[%s4 + $0x50] sm:$0xff]
      %v597 = vld [vmem:[%s4 + $0x58] sm:$0xff]
      %v598 = vld [vmem:[%s4 + $0x60] sm:$0xff]
      %v599 = vld [vmem:[%s4 + $0x68] sm:$0xff]
      %v600 = vld [vmem:[%s4 + $0x70] sm:$0xff]
      %v601 = vld [vmem:[%s4 + $0x78] sm:$0xff]
      %v602 = vld [vmem:[%s4 + $0x80] sm:$0xff]
      %v603 = vld [vmem:[%s4 + $0x88] sm:$0xff]
      %v604 = vld [vmem:[%s4 + $0x90] sm:$0xff]
      %v605 = vld [vmem:[%s4 + $0x98] sm:$0xff]
      %v606 = vld [vmem:[%s4 + $0xa0] sm:$0xff]
      %v607 = vld [vmem:[%s4 + $0xa8] sm:$0xff]
      %v608 = vld [vmem:[%s4 + $0xb0] sm:$0xff]
      %v609 = vld [vmem:[%s4 + $0xb8] sm:$0xff]
      %v610 = vld [vmem:[%s4 + $0xc0] sm:$0xff]
      %v611 = vld [vmem:[%s4 + $0xc8] sm:$0xff]
      %v612 = vld [vmem:[%s4 + $0xd0] sm:$0xff]
      %v613 = vld [vmem:[%s4 + $0xd8] sm:$0xff]
      %v614 = vld [vmem:[%s4 + $0xe0] sm:$0xff]
      %v615 = vld [vmem:[%s4 + $0xe8] sm:$0xff]
      %v616 = vld [vmem:[%s4 + $0xf0] sm:$0xff]
      %v617 = vld [vmem:[%s4 + $0xf8] sm:$0xff]
      %v618 = vld [vmem:[%s4 + $0x100] sm:$0xff]
      %v619 = vld [vmem:[%s4 + $0x108] sm:$0xff]
      %v620 = vld [vmem:[%s4 + $0x110] sm:$0xff]
      %v621 = vld [vmem:[%s4 + $0x118] sm:$0xff]
      %v622 = vld [vmem:[%s4 + $0x120] sm:$0xff]
      %v623 = vld [vmem:[%s4 + $0x128] sm:$0xff]
      %v624 = vld [vmem:[%s4 + $0x130] sm:$0xff]
      %v625 = vld [vmem:[%s4 + $0x138] sm:$0xff]
      %v626 = vld [vmem:[%s4 + $0x140] sm:$0xff]
      %v627 = vld [vmem:[%s4 + $0x148] sm:$0xff]
      %v628 = vld [vmem:[%s4 + $0x150] sm:$0xff]
      %v629 = vld [vmem:[%s4 + $0x158] sm:$0xff]
      %v630 = vld [vmem:[%s4 + $0x160] sm:$0xff]
      %v631 = vld [vmem:[%s4 + $0x168] sm:$0xff]
      %v632 = vld [vmem:[%s4 + $0x170] sm:$0xff]
      %v633 = vld [vmem:[%s4 + $0x178] sm:$0xff]
      %v634 = vld [vmem:[%s4 + $0x180] sm:$0xff]
      %v635 = vld [vmem:[%s4 + $0x188] sm:$0xff]
      %v636 = vld [vmem:[%s4 + $0x190] sm:$0xff]
      %v637 = vld [vmem:[%s4 + $0x198] sm:$0xff]
      %v638 = vld [vmem:[%s4 + $0x1a0] sm:$0xff]
      %v639 = vld [vmem:[%s4 + $0x1a8] sm:$0xff]
      %v640 = vld [vmem:[%s4 + $0x1b0] sm:$0xff]
      %v641 = vld [vmem:[%s4 + $0x1b8] sm:$0xff]
      %v642 = vld [vmem:[%s4 + $0x1c0] sm:$0xff]
      %v643 = vld [vmem:[%s4 + $0x1c8] sm:$0xff]
      %v644 = vld [vmem:[%s4 + $0x1d0] sm:$0xff]
      %v645 = vld [vmem:[%s4 + $0x1d8] sm:$0xff]
      %v646 = vld [vmem:[%s4 + $0x1e0] sm:$0xff]
      %v647 = vld [vmem:[%s4 + $0x1e8] sm:$0xff]
      %v648 = vld [vmem:[%s4 + $0x1f0] sm:$0xff]
      %v649 = vld [vmem:[%s4 + $0x1f8] sm:$0xff]
      %v650 = vld [vmem:[%s4 + $0x200] sm:$0xff]
      %v651 = vld [vmem:[%s4 + $0x208] sm:$0xff]
      %v652 = vld [vmem:[%s4 + $0x210] sm:$0xff]
      %v653 = vld [vmem:[%s4 + $0x218] sm:$0xff]
      %v654 = vld [vmem:[%s4 + $0x220] sm:$0xff]
      %v655 = vld [vmem:[%s4 + $0x228] sm:$0xff]
      %v656 = vld [vmem:[%s4 + $0x230] sm:$0xff]
      %v657 = vld [vmem:[%s4 + $0x238] sm:$0xff]
      %v730 = vunpack.c.l.b16 %v586
      %v731 = vunpack.c.h.b16 %v586
      %v732 = vunpack.c.l.b16 %v587
      %v733 = vunpack.c.h.b16 %v587
      %v734 = vunpack.c.l.b16 %v588
      %v735 = vunpack.c.h.b16 %v588
      %v736 = vunpack.c.l.b16 %v589
      %v737 = vunpack.c.h.b16 %v589
      %v738 = vunpack.c.l.b16 %v590
      %v739 = vunpack.c.h.b16 %v590
      %v740 = vunpack.c.l.b16 %v591
      %v741 = vunpack.c.h.b16 %v591
      %v742 = vunpack.c.l.b16 %v592
      %v743 = vunpack.c.h.b16 %v592
      %v744 = vunpack.c.l.b16 %v593
      %v745 = vunpack.c.h.b16 %v593
      %v746 = vunpack.c.l.b16 %v594
      %v747 = vunpack.c.h.b16 %v594
      %v748 = vunpack.c.l.b16 %v595
      %v749 = vunpack.c.h.b16 %v595
      %v750 = vunpack.c.l.b16 %v596
      %v751 = vunpack.c.h.b16 %v596
      %v752 = vunpack.c.l.b16 %v597
      %v753 = vunpack.c.h.b16 %v597
      %v754 = vunpack.c.l.b16 %v598
      %v755 = vunpack.c.h.b16 %v598
      %v756 = vunpack.c.l.b16 %v599
      %v757 = vunpack.c.h.b16 %v599
      %v758 = vunpack.c.l.b16 %v600
      %v759 = vunpack.c.h.b16 %v600
      %v760 = vunpack.c.l.b16 %v601
      %v761 = vunpack.c.h.b16 %v601
      %v762 = vunpack.c.l.b16 %v602
      %v763 = vunpack.c.h.b16 %v602
      %v764 = vunpack.c.l.b16 %v603
      %v765 = vunpack.c.h.b16 %v603
      %v766 = vunpack.c.l.b16 %v604
      %v767 = vunpack.c.h.b16 %v604
      %v768 = vunpack.c.l.b16 %v605
      %v769 = vunpack.c.h.b16 %v605
      %v770 = vunpack.c.l.b16 %v606
      %v771 = vunpack.c.h.b16 %v606
      %v772 = vunpack.c.l.b16 %v607
      %v773 = vunpack.c.h.b16 %v607
      %v774 = vunpack.c.l.b16 %v608
      %v775 = vunpack.c.h.b16 %v608
      %v776 = vunpack.c.l.b16 %v609
      %v777 = vunpack.c.h.b16 %v609
      %v778 = vunpack.c.l.b16 %v610
      %v779 = vunpack.c.h.b16 %v610
      %v780 = vunpack.c.l.b16 %v611
      %v781 = vunpack.c.h.b16 %v611
      %v782 = vunpack.c.l.b16 %v612
      %v783 = vunpack.c.h.b16 %v612
      %v784 = vunpack.c.l.b16 %v613
      %v785 = vunpack.c.h.b16 %v613
      %v786 = vunpack.c.l.b16 %v614
      %v787 = vunpack.c.h.b16 %v614
      %v788 = vunpack.c.l.b16 %v615
      %v789 = vunpack.c.h.b16 %v615
      %v790 = vunpack.c.l.b16 %v616
      %v791 = vunpack.c.h.b16 %v616
      %v792 = vunpack.c.l.b16 %v617
      %v793 = vunpack.c.h.b16 %v617
      %v794 = vunpack.c.l.b16 %v618
      %v795 = vunpack.c.h.b16 %v618
      %v796 = vunpack.c.l.b16 %v619
      %v797 = vunpack.c.h.b16 %v619
      %v798 = vunpack.c.l.b16 %v620
      %v799 = vunpack.c.h.b16 %v620
      %v800 = vunpack.c.l.b16 %v621
      %v801 = vunpack.c.h.b16 %v621
      %v802 = vunpack.c.l.b16 %v622
      %v803 = vunpack.c.h.b16 %v622
      %v804 = vunpack.c.l.b16 %v623
      %v805 = vunpack.c.h.b16 %v623
      %v806 = vunpack.c.l.b16 %v624
      %v807 = vunpack.c.h.b16 %v624
      %v808 = vunpack.c.l.b16 %v625
      %v809 = vunpack.c.h.b16 %v625
      %v810 = vunpack.c.l.b16 %v626
      %v811 = vunpack.c.h.b16 %v626
      %v812 = vunpack.c.l.b16 %v627
      %v813 = vunpack.c.h.b16 %v627
      %v814 = vunpack.c.l.b16 %v628
      %v815 = vunpack.c.h.b16 %v628
      %v816 = vunpack.c.l.b16 %v629
      %v817 = vunpack.c.h.b16 %v629
      %v818 = vunpack.c.l.b16 %v630
      %v819 = vunpack.c.h.b16 %v630
      %v820 = vunpack.c.l.b16 %v631
      %v821 = vunpack.c.h.b16 %v631
      %v822 = vunpack.c.l.b16 %v632
      %v823 = vunpack.c.h.b16 %v632
      %v824 = vunpack.c.l.b16 %v633
      %v825 = vunpack.c.h.b16 %v633
      %v826 = vunpack.c.l.b16 %v634
      %v827 = vunpack.c.h.b16 %v634
      %v828 = vunpack.c.l.b16 %v635
      %v829 = vunpack.c.h.b16 %v635
      %v830 = vunpack.c.l.b16 %v636
      %v831 = vunpack.c.h.b16 %v636
      %v832 = vunpack.c.l.b16 %v637
      %v833 = vunpack.c.h.b16 %v637
      %v834 = vunpack.c.l.b16 %v638
      %v835 = vunpack.c.h.b16 %v638
      %v836 = vunpack.c.l.b16 %v639
      %v837 = vunpack.c.h.b16 %v639
      %v838 = vunpack.c.l.b16 %v640
      %v839 = vunpack.c.h.b16 %v640
      %v840 = vunpack.c.l.b16 %v641
      %v841 = vunpack.c.h.b16 %v641
      %v842 = vunpack.c.l.b16 %v642
      %v843 = vunpack.c.h.b16 %v642
      %v844 = vunpack.c.l.b16 %v643
      %v845 = vunpack.c.h.b16 %v643
      %v846 = vunpack.c.l.b16 %v644
      %v847 = vunpack.c.h.b16 %v644
      %v848 = vunpack.c.l.b16 %v645
      %v849 = vunpack.c.h.b16 %v645
      %v850 = vunpack.c.l.b16 %v646
      %v851 = vunpack.c.h.b16 %v646
      %v852 = vunpack.c.l.b16 %v647
      %v853 = vunpack.c.h.b16 %v647
      %v854 = vunpack.c.l.b16 %v648
      %v855 = vunpack.c.h.b16 %v648
      %v856 = vunpack.c.l.b16 %v649
      %v857 = vunpack.c.h.b16 %v649
      %v858 = vunpack.c.l.b16 %v650
      %v859 = vunpack.c.h.b16 %v650
      %v860 = vunpack.c.l.b16 %v651
      %v861 = vunpack.c.h.b16 %v651
      %v862 = vunpack.c.l.b16 %v652
      %v863 = vunpack.c.h.b16 %v652
      %v864 = vunpack.c.l.b16 %v653
      %v865 = vunpack.c.h.b16 %v653
      %v866 = vunpack.c.l.b16 %v654
      %v867 = vunpack.c.h.b16 %v654
      %v868 = vunpack.c.l.b16 %v655
      %v869 = vunpack.c.h.b16 %v655
      %v870 = vunpack.c.l.b16 %v656
      %v871 = vunpack.c.h.b16 %v656
      %v872 = vunpack.c.l.b16 %v657
      %v873 = vunpack.c.h.b16 %v657
      %v874 = vpack.c.b16 %v734, %v730
      %v875 = vpack.c.b16 %v735, %v731
      %v876 = vpack.c.b16 %v736, %v732
      %v877 = vpack.c.b16 %v737, %v733
      %v878 = vpack.c.b16 %v742, %v738
      %v879 = vpack.c.b16 %v743, %v739
      %v880 = vpack.c.b16 %v744, %v740
      %v881 = vpack.c.b16 %v745, %v741
      %v882 = vpack.c.b16 %v750, %v746
      %v883 = vpack.c.b16 %v751, %v747
      %v884 = vpack.c.b16 %v752, %v748
      %v885 = vpack.c.b16 %v753, %v749
      %v886 = vpack.c.b16 %v758, %v754
      %v887 = vpack.c.b16 %v759, %v755
      %v888 = vpack.c.b16 %v760, %v756
      %v889 = vpack.c.b16 %v761, %v757
      %v890 = vpack.c.b16 %v766, %v762
      %v891 = vpack.c.b16 %v767, %v763
      %v892 = vpack.c.b16 %v768, %v764
      %v893 = vpack.c.b16 %v769, %v765
      %v894 = vpack.c.b16 %v774, %v770
      %v895 = vpack.c.b16 %v775, %v771
      %v896 = vpack.c.b16 %v776, %v772
      %v897 = vpack.c.b16 %v777, %v773
      %v898 = vpack.c.b16 %v782, %v778
      %v899 = vpack.c.b16 %v783, %v779
      %v900 = vpack.c.b16 %v784, %v780
      %v901 = vpack.c.b16 %v785, %v781
      %v902 = vpack.c.b16 %v790, %v786
      %v903 = vpack.c.b16 %v791, %v787
      %v904 = vpack.c.b16 %v792, %v788
      %v905 = vpack.c.b16 %v793, %v789
      %v906 = vpack.c.b16 %v798, %v794
      %v907 = vpack.c.b16 %v799, %v795
      %v908 = vpack.c.b16 %v800, %v796
      %v909 = vpack.c.b16 %v801, %v797
      %v910 = vpack.c.b16 %v806, %v802
      %v911 = vpack.c.b16 %v807, %v803
      %v912 = vpack.c.b16 %v808, %v804
      %v913 = vpack.c.b16 %v809, %v805
      %v914 = vpack.c.b16 %v814, %v810
      %v915 = vpack.c.b16 %v815, %v811
      %v916 = vpack.c.b16 %v816, %v812
      %v917 = vpack.c.b16 %v817, %v813
      %v918 = vpack.c.b16 %v822, %v818
      %v919 = vpack.c.b16 %v823, %v819
      %v920 = vpack.c.b16 %v824, %v820
      %v921 = vpack.c.b16 %v825, %v821
      %v922 = vpack.c.b16 %v830, %v826
      %v923 = vpack.c.b16 %v831, %v827
      %v924 = vpack.c.b16 %v832, %v828
      %v925 = vpack.c.b16 %v833, %v829
      %v926 = vpack.c.b16 %v838, %v834
      %v927 = vpack.c.b16 %v839, %v835
      %v928 = vpack.c.b16 %v840, %v836
      %v929 = vpack.c.b16 %v841, %v837
      %v930 = vpack.c.b16 %v846, %v842
      %v931 = vpack.c.b16 %v847, %v843
      %v932 = vpack.c.b16 %v848, %v844
      %v933 = vpack.c.b16 %v849, %v845
      %v934 = vpack.c.b16 %v854, %v850
      %v935 = vpack.c.b16 %v855, %v851
      %v936 = vpack.c.b16 %v856, %v852
      %v937 = vpack.c.b16 %v857, %v853
      %v938 = vpack.c.b16 %v862, %v858
      %v939 = vpack.c.b16 %v863, %v859
      %v940 = vpack.c.b16 %v864, %v860
      %v941 = vpack.c.b16 %v865, %v861
      %v942 = vpack.c.b16 %v870, %v866
      %v943 = vpack.c.b16 %v871, %v867
      %v944 = vpack.c.b16 %v872, %v868
      %v945 = vpack.c.b16 %v873, %v869
      %vm1018 = vcmask 261120
      %v1020 = vsel %vm1018, %v585, 0
      %1022 = vmatprep.subr.bf16.mxu0 %v875
      %1023 = vmatpush1.bf16.msra.mxu0 %v874
      %1024 = vmatprep.subr.bf16.mxu0 %v879
      %1025 = vmatpush1.bf16.msra.mxu0 %v878
      %1026 = vmatprep.subr.bf16.mxu0 %v883
      %1027 = vmatpush1.bf16.msra.mxu0 %v882
      %1028 = vmatprep.subr.bf16.mxu0 %v887
      %1029 = vmatpush1.bf16.msra.mxu0 %v886
      %1030 = vmatprep.subr.bf16.mxu0 %v891
      %1031 = vmatpush1.bf16.msra.mxu0 %v890
      %1032 = vmatprep.subr.bf16.mxu0 %v895
      %1033 = vmatpush1.bf16.msra.mxu0 %v894
      %1034 = vmatprep.subr.bf16.mxu0 %v899
      %1035 = vmatpush1.bf16.msra.mxu0 %v898
      %1036 = vmatprep.subr.bf16.mxu0 %v903
      %1037 = vmatpush1.bf16.msra.mxu0 %v902
      %1038 = vmatprep.subr.bf16.mxu0 %v907
      %1039 = vmatpush1.bf16.msra.mxu0 %v906
      %1040 = vmatprep.subr.bf16.mxu0 %v911
      %1041 = vmatpush1.bf16.msra.mxu0 %v910
      %1042 = vmatprep.subr.bf16.mxu0 %v915
      %1043 = vmatpush1.bf16.msra.mxu0 %v914
      %1044 = vmatprep.subr.bf16.mxu0 %v919
      %1045 = vmatpush1.bf16.msra.mxu0 %v918
      %1046 = vmatprep.subr.bf16.mxu0 %v923
      %1047 = vmatpush1.bf16.msra.mxu0 %v922
      %1048 = vmatprep.subr.bf16.mxu0 %v927
      %1049 = vmatpush1.bf16.msra.mxu0 %v926
      %1050 = vmatprep.subr.bf16.mxu0 %v931
      %1051 = vmatpush1.bf16.msra.mxu0 %v930
      %1052 = vmatprep.subr.bf16.mxu0 %v935
      %1053 = vmatpush1.bf16.msra.mxu0 %v934
      %1054 = vmatprep.mubr.bf16.mxu0 %v584
      %1055 = vmatmul.mubr.bf16.gmra.mrb[0].mxu0 %v583
      %v1056 = vpop.f32.mrb[0].mxu0
      %v1057 = vadd.f32 0.0, %v1056
      %v1058 = vpop.f32.mrb[0].mxu0
      %v1059 = vadd.f32 0.0, %v1058
      %v1060 = vpop.f32.mrb[0].mxu0
      %v1061 = vpop.f32.mrb[0].mxu0
      %1062 = vdwg.mxu0
      %1063 = vmatprep.subr.bf16.mxu0 %v939
      %1064 = vmatpush1.bf16.msra.mxu0 %v938
      %1065 = vmatprep.subr.bf16.mxu0 %v943
      %1066 = vmatpush1.bf16.msra.mxu0 %v942
      %1067 = vmatprep.subr.bf16.mxu0 0
      %1068 = vmatpush1.bf16.msra.mxu0 0
      %1069 = vmatprep.subr.bf16.mxu0 0
      %1070 = vmatpush1.bf16.msra.mxu0 0
      %1071 = vmatprep.subr.bf16.mxu0 0
      %1072 = vmatpush1.bf16.msra.mxu0 0
      %1073 = vmatprep.subr.bf16.mxu0 0
      %1074 = vmatpush1.bf16.msra.mxu0 0
      %1075 = vmatprep.subr.bf16.mxu0 0
      %1076 = vmatpush1.bf16.msra.mxu0 0
      %1077 = vmatprep.subr.bf16.mxu0 0
      %1078 = vmatpush1.bf16.msra.mxu0 0
      %1079 = vmatprep.subr.bf16.mxu0 0
      %1080 = vmatpush1.bf16.msra.mxu0 0
      %1081 = vmatprep.subr.bf16.mxu0 0
      %1082 = vmatpush1.bf16.msra.mxu0 0
      %1083 = vmatprep.subr.bf16.mxu0 0
      %1084 = vmatpush1.bf16.msra.mxu0 0
      %1085 = vmatprep.subr.bf16.mxu0 0
      %1086 = vmatpush1.bf16.msra.mxu0 0
      %1087 = vmatprep.subr.bf16.mxu0 0
      %1088 = vmatpush1.bf16.msra.mxu0 0
      %1089 = vmatprep.subr.bf16.mxu0 0
      %1090 = vmatpush1.bf16.msra.mxu0 0
      %1091 = vmatprep.subr.bf16.mxu0 0
      %1092 = vmatpush1.bf16.msra.mxu0 0
      %1093 = vmatprep.subr.bf16.mxu0 0
      %1094 = vmatpush1.bf16.msra.mxu0 0
      %1095 = vmatprep.mubr.bf16.mxu0 0
      %1096 = vmatmul.mubr.bf16.gmra.mrb[0].mxu0 %v1020
      %v1097 = vpop.f32.mrb[0].mxu0
      %v1098 = vadd.f32 %v1057, %v1097
      %v1099 = vpop.f32.mrb[0].mxu0
      %v1100 = vadd.f32 %v1059, %v1099
      %v1101 = vpop.f32.mrb[0].mxu0
      %v1102 = vpop.f32.mrb[0].mxu0
      %1103 = vdwg.mxu0
      %1104 = vmatprep.subr.bf16.mxu0 %v877
      %1105 = vmatpush1.bf16.msra.mxu0 %v876
      %1106 = vmatprep.subr.bf16.mxu0 %v881
      %1107 = vmatpush1.bf16.msra.mxu0 %v880
      %1108 = vmatprep.subr.bf16.mxu0 %v885
      %1109 = vmatpush1.bf16.msra.mxu0 %v884
      %1110 = vmatprep.subr.bf16.mxu0 %v889
      %1111 = vmatpush1.bf16.msra.mxu0 %v888
      %1112 = vmatprep.subr.bf16.mxu0 %v893
      %1113 = vmatpush1.bf16.msra.mxu0 %v892
      %1114 = vmatprep.subr.bf16.mxu0 %v897
      %1115 = vmatpush1.bf16.msra.mxu0 %v896
      %1116 = vmatprep.subr.bf16.mxu0 %v901
      %1117 = vmatpush1.bf16.msra.mxu0 %v900
      %1118 = vmatprep.subr.bf16.mxu0 %v905
      %1119 = vmatpush1.bf16.msra.mxu0 %v904
      %1120 = vmatprep.subr.bf16.mxu0 %v909
      %1121 = vmatpush1.bf16.msra.mxu0 %v908
      %1122 = vmatprep.subr.bf16.mxu0 %v913
      %1123 = vmatpush1.bf16.msra.mxu0 %v912
      %1124 = vmatprep.subr.bf16.mxu0 %v917
      %1125 = vmatpush1.bf16.msra.mxu0 %v916
      %1126 = vmatprep.subr.bf16.mxu0 %v921
      %1127 = vmatpush1.bf16.msra.mxu0 %v920
      %1128 = vmatprep.subr.bf16.mxu0 %v925
      %1129 = vmatpush1.bf16.msra.mxu0 %v924
      %1130 = vmatprep.subr.bf16.mxu0 %v929
      %1131 = vmatpush1.bf16.msra.mxu0 %v928
      %1132 = vmatprep.subr.bf16.mxu0 %v933
      %1133 = vmatpush1.bf16.msra.mxu0 %v932
      %1134 = vmatprep.subr.bf16.mxu0 %v937
      %1135 = vmatpush1.bf16.msra.mxu0 %v936
      %1136 = vmatprep.mubr.bf16.mxu0 %v584
      %1137 = vmatmul.mubr.bf16.gmra.mrb[0].mxu0 %v583
      %v1138 = vpop.f32.mrb[0].mxu0
      %v1139 = vadd.f32 0.0, %v1138
      %v1140 = vpop.f32.mrb[0].mxu0
      %v1141 = vadd.f32 0.0, %v1140
      %v1142 = vpop.f32.mrb[0].mxu0
      %v1143 = vpop.f32.mrb[0].mxu0
      %1144 = vdwg.mxu0
      %1145 = vmatprep.subr.bf16.mxu0 %v941
      %1146 = vmatpush1.bf16.msra.mxu0 %v940
      %1147 = vmatprep.subr.bf16.mxu0 %v945
      %1148 = vmatpush1.bf16.msra.mxu0 %v944
      %1149 = vmatprep.subr.bf16.mxu0 0
      %1150 = vmatpush1.bf16.msra.mxu0 0
      %1151 = vmatprep.subr.bf16.mxu0 0
      %1152 = vmatpush1.bf16.msra.mxu0 0
      %1153 = vmatprep.subr.bf16.mxu0 0
      %1154 = vmatpush1.bf16.msra.mxu0 0
      %1155 = vmatprep.subr.bf16.mxu0 0
      %1156 = vmatpush1.bf16.msra.mxu0 0
      %1157 = vmatprep.subr.bf16.mxu0 0
      %1158 = vmatpush1.bf16.msra.mxu0 0
      %1159 = vmatprep.subr.bf16.mxu0 0
      %1160 = vmatpush1.bf16.msra.mxu0 0
      %1161 = vmatprep.subr.bf16.mxu0 0
      %1162 = vmatpush1.bf16.msra.mxu0 0
      %1163 = vmatprep.subr.bf16.mxu0 0
      %1164 = vmatpush1.bf16.msra.mxu0 0
      %1165 = vmatprep.subr.bf16.mxu0 0
      %1166 = vmatpush1.bf16.msra.mxu0 0
      %1167 = vmatprep.subr.bf16.mxu0 0
      %1168 = vmatpush1.bf16.msra.mxu0 0
      %1169 = vmatprep.subr.bf16.mxu0 0
      %1170 = vmatpush1.bf16.msra.mxu0 0
      %1171 = vmatprep.subr.bf16.mxu0 0
      %1172 = vmatpush1.bf16.msra.mxu0 0
      %1173 = vmatprep.subr.bf16.mxu0 0
      %1174 = vmatpush1.bf16.msra.mxu0 0
      %1175 = vmatprep.subr.bf16.mxu0 0
      %1176 = vmatpush1.bf16.msra.mxu0 0
      %1177 = vmatprep.mubr.bf16.mxu0 0
      %1178 = vmatmul.mubr.bf16.gmra.mrb[0].mxu0 %v1020
      %v1179 = vpop.f32.mrb[0].mxu0
      %v1180 = vadd.f32 %v1139, %v1179
      %v1181 = vpop.f32.mrb[0].mxu0
      %v1182 = vadd.f32 %v1141, %v1181
      %v1183 = vpop.f32.mrb[0].mxu0
      %v1184 = vpop.f32.mrb[0].mxu0
      %1185 = vdwg.mxu0
      %1190 = vrot.lane.b32.xlu0 %v1098, 127
      %v1191 = vpop.permute.xlu0 %1190
      %1192 = vrot.lane.b32.xlu0 %v1100, 127
      %v1193 = vpop.permute.xlu0 %1192
      %1194 = vrot.lane.b32.xlu0 %v1180, 127
      %v1195 = vpop.permute.xlu0 %1194
      %1196 = vrot.lane.b32.xlu0 %v1182, 127
      %v1197 = vpop.permute.xlu0 %1196
      %v1198 = vsel %vm319, %v1191, %v1193
      %v1199 = vsel %vm319, %v1193, %v1195
      %v1200 = vsel %vm319, %v1195, %v1197
      %1205 = vrot.lane.b32.xlu0 %v1098, 126
      %v1206 = vpop.permute.xlu0 %1205
      %1207 = vrot.lane.b32.xlu0 %v1100, 126
      %v1208 = vpop.permute.xlu0 %1207
      %1209 = vrot.lane.b32.xlu0 %v1180, 126
      %v1210 = vpop.permute.xlu0 %1209
      %1211 = vrot.lane.b32.xlu0 %v1182, 126
      %v1212 = vpop.permute.xlu0 %1211
      %v1213 = vsel %vm331, %v1206, %v1208
      %v1214 = vsel %vm331, %v1208, %v1210
      %v1215 = vsel %vm331, %v1210, %v1212
      %1220 = vrot.lane.b32.xlu0 %v1098, 118
      %v1221 = vpop.permute.xlu0 %1220
      %1222 = vrot.lane.b32.xlu0 %v1100, 118
      %v1223 = vpop.permute.xlu0 %1222
      %1224 = vrot.lane.b32.xlu0 %v1180, 118
      %v1225 = vpop.permute.xlu0 %1224
      %1226 = vrot.lane.b32.xlu0 %v1182, 118
      %v1227 = vpop.permute.xlu0 %1226
      %vm1228 = vcmask 965632
      %v1229 = vsel %vm1228, %v1221, %v1223
      %v1230 = vsel %vm1228, %v1223, %v1225
      %v1231 = vsel %vm1228, %v1225, %v1227
      %1236 = vrot.lane.b32.xlu0 %v1098, 117
      %v1237 = vpop.permute.xlu0 %1236
      %1238 = vrot.lane.b32.xlu0 %v1100, 117
      %v1239 = vpop.permute.xlu0 %1238
      %1240 = vrot.lane.b32.xlu0 %v1180, 117
      %v1241 = vpop.permute.xlu0 %1240
      %1242 = vrot.lane.b32.xlu0 %v1182, 117
      %v1243 = vpop.permute.xlu0 %1242
      %vm1244 = vcmask 957440
      %v1245 = vsel %vm1244, %v1237, %v1239
      %v1246 = vsel %vm1244, %v1239, %v1241
      %v1247 = vsel %vm1244, %v1241, %v1243
      %1252 = vrot.lane.b32.xlu0 %v1098, 116
      %v1253 = vpop.permute.xlu0 %1252
      %1254 = vrot.lane.b32.xlu0 %v1100, 116
      %v1255 = vpop.permute.xlu0 %1254
      %1256 = vrot.lane.b32.xlu0 %v1180, 116
      %v1257 = vpop.permute.xlu0 %1256
      %1258 = vrot.lane.b32.xlu0 %v1182, 116
      %v1259 = vpop.permute.xlu0 %1258
      %vm1260 = vcmask 949248
      %v1261 = vsel %vm1260, %v1253, %v1255
      %v1262 = vsel %vm1260, %v1255, %v1257
      %v1263 = vsel %vm1260, %v1257, %v1259
      %1268 = vrot.lane.b32.xlu0 %v1098, 108
      %v1269 = vpop.permute.xlu0 %1268
      %1270 = vrot.lane.b32.xlu0 %v1100, 108
      %v1271 = vpop.permute.xlu0 %1270
      %1272 = vrot.lane.b32.xlu0 %v1180, 108
      %v1273 = vpop.permute.xlu0 %1272
      %1274 = vrot.lane.b32.xlu0 %v1182, 108
      %v1275 = vpop.permute.xlu0 %1274
      %v1276 = vsel %vm367, %v1269, %v1271
      %v1277 = vsel %vm367, %v1271, %v1273
      %v1278 = vsel %vm367, %v1273, %v1275
      %1283 = vrot.lane.b32.xlu0 %v1098, 107
      %v1284 = vpop.permute.xlu0 %1283
      %1285 = vrot.lane.b32.xlu0 %v1100, 107
      %v1286 = vpop.permute.xlu0 %1285
      %1287 = vrot.lane.b32.xlu0 %v1180, 107
      %v1288 = vpop.permute.xlu0 %1287
      %1289 = vrot.lane.b32.xlu0 %v1182, 107
      %v1290 = vpop.permute.xlu0 %1289
      %vm1291 = vcmask 875520
      %v1292 = vsel %vm1291, %v1284, %v1286
      %v1293 = vsel %vm1291, %v1286, %v1288
      %v1294 = vsel %vm1291, %v1288, %v1290
      %1299 = vrot.lane.b32.xlu0 %v1098, 106
      %v1300 = vpop.permute.xlu0 %1299
      %1301 = vrot.lane.b32.xlu0 %v1100, 106
      %v1302 = vpop.permute.xlu0 %1301
      %1303 = vrot.lane.b32.xlu0 %v1180, 106
      %v1304 = vpop.permute.xlu0 %1303
      %1305 = vrot.lane.b32.xlu0 %v1182, 106
      %v1306 = vpop.permute.xlu0 %1305
      %vm1307 = vcmask 867328
      %v1308 = vsel %vm1307, %v1300, %v1302
      %v1309 = vsel %vm1307, %v1302, %v1304
      %v1310 = vsel %vm1307, %v1304, %v1306
      %v1315 = vld [vmem:[%s5] sm:$0xf]
      %v1316 = vpack.c.bf16 %v1198, %v1098
      %v1317 = vpack.c.bf16 %v1199, %v1100
      %v1318 = vpack.c.bf16 %v1200, %v1180
      %v1319 = vpack.c.bf16 %v1197, %v1182
      %v1320 = vpack.c.bf16 %v1229, %v1213
      %v1321 = vpack.c.bf16 %v1230, %v1214
      %v1322 = vpack.c.bf16 %v1231, %v1215
      %v1323 = vpack.c.bf16 %v1227, %v1212
      %v1324 = vpack.c.bf16 %v1261, %v1245
      %v1325 = vpack.c.bf16 %v1262, %v1246
      %v1326 = vpack.c.bf16 %v1263, %v1247
      %v1327 = vpack.c.bf16 %v1259, %v1243
      %v1328 = vpack.c.bf16 %v1292, %v1276
      %v1329 = vpack.c.bf16 %v1293, %v1277
      %v1330 = vpack.c.bf16 %v1294, %v1278
      %v1331 = vpack.c.bf16 %v1290, %v1275
      %v1332 = vpack.c.bf16 %v1308, %v1308
      %v1333 = vpack.c.bf16 %v1309, %v1309
      %v1334 = vpack.c.bf16 %v1310, %v1310
      %v1335 = vpack.c.bf16 %v1306, %v1306
      %v1337 = vsel %vm431, %v1315, 0
      %v1340 = vsel %vm435, %v1332, 0
      %v1343 = vsel %vm435, %v1333, 0
      %v1346 = vsel %vm435, %v1334, 0
      %v1349 = vsel %vm435, %v1335, 0
      %1351 = vmatprep.subr.bf16.mxu0 %v1317
      %1352 = vmatpush1.bf16.msra.mxu0 %v1316
      %1353 = vmatprep.subr.bf16.mxu0 %v1321
      %1354 = vmatpush1.bf16.msra.mxu0 %v1320
      %1355 = vmatprep.subr.bf16.mxu0 %v1325
      %1356 = vmatpush1.bf16.msra.mxu0 %v1324
      %1357 = vmatprep.subr.bf16.mxu0 %v1329
      %1358 = vmatpush1.bf16.msra.mxu0 %v1328
      %1359 = vmatprep.subr.bf16.mxu0 %v1343
      %1360 = vmatpush1.bf16.msra.mxu0 %v1340
      %1361 = vmatprep.subr.bf16.mxu0 0
      %1362 = vmatpush1.bf16.msra.mxu0 0
      %1363 = vmatprep.subr.bf16.mxu0 0
      %1364 = vmatpush1.bf16.msra.mxu0 0
      %1365 = vmatprep.subr.bf16.mxu0 0
      %1366 = vmatpush1.bf16.msra.mxu0 0
      %1367 = vmatprep.subr.bf16.mxu0 0
      %1368 = vmatpush1.bf16.msra.mxu0 0
      %1369 = vmatprep.subr.bf16.mxu0 0
      %1370 = vmatpush1.bf16.msra.mxu0 0
      %1371 = vmatprep.subr.bf16.mxu0 0
      %1372 = vmatpush1.bf16.msra.mxu0 0
      %1373 = vmatprep.subr.bf16.mxu0 0
      %1374 = vmatpush1.bf16.msra.mxu0 0
      %1375 = vmatprep.subr.bf16.mxu0 0
      %1376 = vmatpush1.bf16.msra.mxu0 0
      %1377 = vmatprep.subr.bf16.mxu0 0
      %1378 = vmatpush1.bf16.msra.mxu0 0
      %1379 = vmatprep.subr.bf16.mxu0 0
      %1380 = vmatpush1.bf16.msra.mxu0 0
      %1381 = vmatprep.subr.bf16.mxu0 0
      %1382 = vmatpush1.bf16.msra.mxu0 0
      %1383 = vmatprep.mubr.bf16.mxu0 0
      %1384 = vmatmul.mubr.bf16.gmra.mrb[0].mxu0 %v1337
      %v1385 = vpop.f32.mrb[0].mxu0
      %v1386 = vadd.f32 0.0, %v1385
      %v1387 = vpop.f32.mrb[0].mxu0
      %v1388 = vadd.f32 0.0, %v1387
      %v1389 = vpop.f32.mrb[0].mxu0
      %v1390 = vpop.f32.mrb[0].mxu0
      %1391 = vdwg.mxu0
      %1392 = vmatprep.subr.bf16.mxu0 %v1319
      %1393 = vmatpush1.bf16.msra.mxu0 %v1318
      %1394 = vmatprep.subr.bf16.mxu0 %v1323
      %1395 = vmatpush1.bf16.msra.mxu0 %v1322
      %1396 = vmatprep.subr.bf16.mxu0 %v1327
      %1397 = vmatpush1.bf16.msra.mxu0 %v1326
      %1398 = vmatprep.subr.bf16.mxu0 %v1331
      %1399 = vmatpush1.bf16.msra.mxu0 %v1330
      %1400 = vmatprep.subr.bf16.mxu0 %v1349
      %1401 = vmatpush1.bf16.msra.mxu0 %v1346
      %1402 = vmatprep.subr.bf16.mxu0 0
      %1403 = vmatpush1.bf16.msra.mxu0 0
      %1404 = vmatprep.subr.bf16.mxu0 0
      %1405 = vmatpush1.bf16.msra.mxu0 0
      %1406 = vmatprep.subr.bf16.mxu0 0
      %1407 = vmatpush1.bf16.msra.mxu0 0
      %1408 = vmatprep.subr.bf16.mxu0 0
      %1409 = vmatpush1.bf16.msra.mxu0 0
      %1410 = vmatprep.subr.bf16.mxu0 0
      %1411 = vmatpush1.bf16.msra.mxu0 0
      %1412 = vmatprep.subr.bf16.mxu0 0
      %1413 = vmatpush1.bf16.msra.mxu0 0
      %1414 = vmatprep.subr.bf16.mxu0 0
      %1415 = vmatpush1.bf16.msra.mxu0 0
      %1416 = vmatprep.subr.bf16.mxu0 0
      %1417 = vmatpush1.bf16.msra.mxu0 0
      %1418 = vmatprep.subr.bf16.mxu0 0
      %1419 = vmatpush1.bf16.msra.mxu0 0
      %1420 = vmatprep.subr.bf16.mxu0 0
      %1421 = vmatpush1.bf16.msra.mxu0 0
      %1422 = vmatprep.subr.bf16.mxu0 0
      %1423 = vmatpush1.bf16.msra.mxu0 0
      %1424 = vmatprep.mubr.bf16.mxu0 0
      %1425 = vmatmul.mubr.bf16.gmra.mrb[0].mxu0 %v1337
      %v1426 = vpop.f32.mrb[0].mxu0
      %v1427 = vadd.f32 0.0, %v1426
      %v1428 = vpop.f32.mrb[0].mxu0
      %v1429 = vadd.f32 0.0, %v1428
      %v1430 = vpop.f32.mrb[0].mxu0
      %v1431 = vpop.f32.mrb[0].mxu0
      %1432 = vdwg.mxu0
      %v1433 = vld [vmem:[%s7] sm:$0xff]
      %v1434 = vld [vmem:[%s7 + $0x8] sm:$0xff]
      %v1435 = vld [vmem:[%s7 + $0x10] sm:$0xff]
      %v1436 = vld [vmem:[%s7 + $0x18] sm:$0xff]
      %v1437 = vld [vmem:[%s7 + $0x20] sm:$0xff]
      %v1438 = vld [vmem:[%s7 + $0x28] sm:$0xff]
      %v1439 = vld [vmem:[%s7 + $0x30] sm:$0xff]
      %v1440 = vld [vmem:[%s7 + $0x38] sm:$0xff]
      %v1441 = vld [vmem:[%s7 + $0x40] sm:$0xff]
      %v1442 = vld [vmem:[%s7 + $0x48] sm:$0xff]
      %v1443 = vld [vmem:[%s7 + $0x50] sm:$0xff]
      %v1444 = vld [vmem:[%s7 + $0x58] sm:$0xff]
      %v1445 = vld [vmem:[%s7 + $0x60] sm:$0xff]
      %v1446 = vld [vmem:[%s7 + $0x68] sm:$0xff]
      %v1447 = vld [vmem:[%s7 + $0x70] sm:$0xff]
      %v1448 = vld [vmem:[%s7 + $0x78] sm:$0xff]
      %v1449 = vld [vmem:[%s7 + $0x80] sm:$0xff]
      %v1450 = vld [vmem:[%s7 + $0x88] sm:$0xff]
      %v1451 = vld [vmem:[%s7 + $0x90] sm:$0xff]
      %v1452 = vld [vmem:[%s7 + $0x98] sm:$0xff]
      %v1453 = vld [vmem:[%s7 + $0xa0] sm:$0xff]
      %v1454 = vld [vmem:[%s7 + $0xa8] sm:$0xff]
      %v1455 = vld [vmem:[%s7 + $0xb0] sm:$0xff]
      %v1456 = vld [vmem:[%s7 + $0xb8] sm:$0xff]
      %v1457 = vld [vmem:[%s7 + $0xc0] sm:$0xff]
      %v1458 = vld [vmem:[%s7 + $0xc8] sm:$0xff]
      %v1459 = vld [vmem:[%s7 + $0xd0] sm:$0xff]
      %v1460 = vld [vmem:[%s7 + $0xd8] sm:$0xff]
      %v1461 = vld [vmem:[%s7 + $0xe0] sm:$0xff]
      %v1462 = vld [vmem:[%s7 + $0xe8] sm:$0xff]
      %v1463 = vld [vmem:[%s7 + $0xf0] sm:$0xff]
      %v1464 = vld [vmem:[%s7 + $0xf8] sm:$0xff]
      %v1465 = vld [vmem:[%s7 + $0x100] sm:$0xff]
      %v1466 = vld [vmem:[%s7 + $0x108] sm:$0xff]
      %v1467 = vld [vmem:[%s7 + $0x110] sm:$0xff]
      %v1468 = vld [vmem:[%s7 + $0x118] sm:$0xff]
      %v1469 = vld [vmem:[%s7 + $0x120] sm:$0xff]
      %v1470 = vld [vmem:[%s7 + $0x128] sm:$0xff]
      %v1471 = vld [vmem:[%s7 + $0x130] sm:$0xff]
      %v1472 = vld [vmem:[%s7 + $0x138] sm:$0xff]
      %v1473 = vld [vmem:[%s7 + $0x140] sm:$0xff]
      %v1474 = vld [vmem:[%s7 + $0x148] sm:$0xff]
      %v1475 = vld [vmem:[%s7 + $0x150] sm:$0xff]
      %v1476 = vld [vmem:[%s7 + $0x158] sm:$0xff]
      %v1477 = vld [vmem:[%s7 + $0x160] sm:$0xff]
      %v1478 = vld [vmem:[%s7 + $0x168] sm:$0xff]
      %v1479 = vld [vmem:[%s7 + $0x170] sm:$0xff]
      %v1480 = vld [vmem:[%s7 + $0x178] sm:$0xff]
      %v1481 = vld [vmem:[%s7 + $0x180] sm:$0xff]
      %v1482 = vld [vmem:[%s7 + $0x188] sm:$0xff]
      %v1483 = vld [vmem:[%s7 + $0x190] sm:$0xff]
      %v1484 = vld [vmem:[%s7 + $0x198] sm:$0xff]
      %v1485 = vld [vmem:[%s7 + $0x1a0] sm:$0xff]
      %v1486 = vld [vmem:[%s7 + $0x1a8] sm:$0xff]
      %v1487 = vld [vmem:[%s7 + $0x1b0] sm:$0xff]
      %v1488 = vld [vmem:[%s7 + $0x1b8] sm:$0xff]
      %v1489 = vld [vmem:[%s7 + $0x1c0] sm:$0xff]
      %v1490 = vld [vmem:[%s7 + $0x1c8] sm:$0xff]
      %v1491 = vld [vmem:[%s7 + $0x1d0] sm:$0xff]
      %v1492 = vld [vmem:[%s7 + $0x1d8] sm:$0xff]
      %v1493 = vld [vmem:[%s7 + $0x1e0] sm:$0xff]
      %v1494 = vld [vmem:[%s7 + $0x1e8] sm:$0xff]
      %v1495 = vld [vmem:[%s7 + $0x1f0] sm:$0xff]
      %v1496 = vld [vmem:[%s7 + $0x1f8] sm:$0xff]
      %v1497 = vld [vmem:[%s7 + $0x200] sm:$0xff]
      %v1498 = vld [vmem:[%s7 + $0x208] sm:$0xff]
      %v1499 = vld [vmem:[%s7 + $0x210] sm:$0xff]
      %v1500 = vld [vmem:[%s7 + $0x218] sm:$0xff]
      %v1501 = vld [vmem:[%s7 + $0x220] sm:$0xff]
      %v1502 = vld [vmem:[%s7 + $0x228] sm:$0xff]
      %v1503 = vld [vmem:[%s7 + $0x230] sm:$0xff]
      %v1504 = vld [vmem:[%s7 + $0x238] sm:$0xff]
      %v1505 = vld [vmem:[%s7 + $0x240] sm:$0xff]
      %v1506 = vld [vmem:[%s7 + $0x248] sm:$0xff]
      %v1507 = vld [vmem:[%s7 + $0x250] sm:$0xff]
      %v1508 = vld [vmem:[%s7 + $0x258] sm:$0xff]
      %v1509 = vld [vmem:[%s7 + $0x260] sm:$0xff]
      %v1510 = vld [vmem:[%s7 + $0x268] sm:$0xff]
      %v1511 = vld [vmem:[%s7 + $0x270] sm:$0xff]
      %v1512 = vld [vmem:[%s7 + $0x278] sm:$0xff]
      %v1513 = vld [vmem:[%s7 + $0x280] sm:$0xff]
      %v1514 = vld [vmem:[%s7 + $0x288] sm:$0xff]
      %v1515 = vld [vmem:[%s7 + $0x290] sm:$0xff]
      %v1516 = vld [vmem:[%s7 + $0x298] sm:$0xff]
      %v1517 = vld [vmem:[%s7 + $0x2a0] sm:$0xff]
      %v1518 = vld [vmem:[%s7 + $0x2a8] sm:$0xff]
      %v1519 = vld [vmem:[%s7 + $0x2b0] sm:$0xff]
      %v1520 = vld [vmem:[%s7 + $0x2b8] sm:$0xff]
      %v1521 = vld [vmem:[%s7 + $0x2c0] sm:$0xff]
      %v1522 = vld [vmem:[%s7 + $0x2c8] sm:$0xff]
      %v1523 = vld [vmem:[%s7 + $0x2d0] sm:$0xff]
      %v1524 = vld [vmem:[%s7 + $0x2d8] sm:$0xff]
      %v1525 = vld [vmem:[%s7 + $0x2e0] sm:$0xff]
      %v1526 = vld [vmem:[%s7 + $0x2e8] sm:$0xff]
      %v1527 = vld [vmem:[%s7 + $0x2f0] sm:$0xff]
      %v1528 = vld [vmem:[%s7 + $0x2f8] sm:$0xff]
      %v1529 = vld [vmem:[%s7 + $0x300] sm:$0xff]
      %v1530 = vld [vmem:[%s7 + $0x308] sm:$0xff]
      %v1531 = vld [vmem:[%s7 + $0x310] sm:$0xff]
      %v1532 = vld [vmem:[%s7 + $0x318] sm:$0xff]
      %v1533 = vld [vmem:[%s7 + $0x320] sm:$0xff]
      %v1534 = vld [vmem:[%s7 + $0x328] sm:$0xff]
      %v1535 = vld [vmem:[%s7 + $0x330] sm:$0x3]
      %v1536 = vld [vmem:[%s7 + $0x338] sm:$0x3]
      %v1537 = vld [vmem:[%s6] sm:$0xff]
      %1539 = vset.pattern.permute.xlu0 0
      %1540 = vperm.xlu0 %1539, %v1537
      %v1541 = vpop.permute.xlu0 %1540
      %vm1543 = vcmask 211968
      %v1545 = vsel %vm1543, %v1429, 0
      %vm1547 = vcmask 1041408
      %v1549 = vsel %vm1547, %v1535, 0
      %v1552 = vsel %vm1547, %v1536, 0
      %1554 = vmatprep.subr.mxu0 %v1434
      %1555 = vmatpush1.msra.mxu0 %v1433
      %1556 = vmatprep.subr.mxu0 %v1436
      %1557 = vmatpush1.msra.mxu0 %v1435
      %1558 = vmatprep.subr.mxu0 %v1438
      %1559 = vmatpush1.msra.mxu0 %v1437
      %1560 = vmatprep.subr.mxu0 %v1440
      %1561 = vmatpush1.msra.mxu0 %v1439
      %1562 = vmatprep.subr.mxu0 %v1442
      %1563 = vmatpush1.msra.mxu0 %v1441
      %1564 = vmatprep.subr.mxu0 %v1444
      %1565 = vmatpush1.msra.mxu0 %v1443
      %1566 = vmatprep.subr.mxu0 %v1446
      %1567 = vmatpush1.msra.mxu0 %v1445
      %1568 = vmatprep.subr.mxu0 %v1448
      %1569 = vmatpush1.msra.mxu0 %v1447
      %1570 = vmatprep.subr.mxu0 %v1450
      %1571 = vmatpush1.msra.mxu0 %v1449
      %1572 = vmatprep.subr.mxu0 %v1452
      %1573 = vmatpush1.msra.mxu0 %v1451
      %1574 = vmatprep.subr.mxu0 %v1454
      %1575 = vmatpush1.msra.mxu0 %v1453
      %1576 = vmatprep.subr.mxu0 %v1456
      %1577 = vmatpush1.msra.mxu0 %v1455
      %1578 = vmatprep.subr.mxu0 %v1458
      %1579 = vmatpush1.msra.mxu0 %v1457
      %1580 = vmatprep.subr.mxu0 %v1460
      %1581 = vmatpush1.msra.mxu0 %v1459
      %1582 = vmatprep.subr.mxu0 %v1462
      %1583 = vmatpush1.msra.mxu0 %v1461
      %1584 = vmatprep.subr.mxu0 %v1464
      %1585 = vmatpush1.msra.mxu0 %v1463
      %1586 = vmatprep.subr.mxu0 %v1466
      %1587 = vmatpush1.msra.mxu0 %v1465
      %1588 = vmatprep.subr.mxu0 %v1468
      %1589 = vmatpush1.msra.mxu0 %v1467
      %1590 = vmatprep.subr.mxu0 %v1470
      %1591 = vmatpush1.msra.mxu0 %v1469
      %1592 = vmatprep.subr.mxu0 %v1472
      %1593 = vmatpush1.msra.mxu0 %v1471
      %1594 = vmatprep.subr.mxu0 %v1474
      %1595 = vmatpush1.msra.mxu0 %v1473
      %1596 = vmatprep.subr.mxu0 %v1476
      %1597 = vmatpush1.msra.mxu0 %v1475
      %1598 = vmatprep.subr.mxu0 %v1478
      %1599 = vmatpush1.msra.mxu0 %v1477
      %1600 = vmatprep.subr.mxu0 %v1480
      %1601 = vmatpush1.msra.mxu0 %v1479
      %1602 = vmatprep.subr.mxu0 %v1482
      %1603 = vmatpush1.msra.mxu0 %v1481
      %1604 = vmatprep.subr.mxu0 %v1484
      %1605 = vmatpush1.msra.mxu0 %v1483
      %1606 = vmatprep.subr.mxu0 %v1486
      %1607 = vmatpush1.msra.mxu0 %v1485
      %1608 = vmatprep.subr.mxu0 %v1488
      %1609 = vmatpush1.msra.mxu0 %v1487
      %1610 = vmatprep.subr.mxu0 %v1490
      %1611 = vmatpush1.msra.mxu0 %v1489
      %1612 = vmatprep.subr.mxu0 %v1492
      %1613 = vmatpush1.msra.mxu0 %v1491
      %1614 = vmatprep.subr.mxu0 %v1494
      %1615 = vmatpush1.msra.mxu0 %v1493
      %1616 = vmatprep.subr.mxu0 %v1496
      %1617 = vmatpush1.msra.mxu0 %v1495
      %1618 = vmatprep.mubr.f32.mxu0 %v1388
      %1619 = vmatmul.mubr.f32.gmra.mrb[0].mxu0 %v1386
      %v1620 = vpop.f32.mrb[0].mxu0
      %v1621 = vadd.f32 %v1541, %v1620
      %v1622 = vpop.f32.mrb[0].mxu0
      %v1623 = vadd.f32 %v1541, %v1622
      %1624 = vdwg.mxu0
      %1625 = vmatprep.subr.mxu0 %v1498
      %1626 = vmatpush1.msra.mxu0 %v1497
      %1627 = vmatprep.subr.mxu0 %v1500
      %1628 = vmatpush1.msra.mxu0 %v1499
      %1629 = vmatprep.subr.mxu0 %v1502
      %1630 = vmatpush1.msra.mxu0 %v1501
      %1631 = vmatprep.subr.mxu0 %v1504
      %1632 = vmatpush1.msra.mxu0 %v1503
      %1633 = vmatprep.subr.mxu0 %v1506
      %1634 = vmatpush1.msra.mxu0 %v1505
      %1635 = vmatprep.subr.mxu0 %v1508
      %1636 = vmatpush1.msra.mxu0 %v1507
      %1637 = vmatprep.subr.mxu0 %v1510
      %1638 = vmatpush1.msra.mxu0 %v1509
      %1639 = vmatprep.subr.mxu0 %v1512
      %1640 = vmatpush1.msra.mxu0 %v1511
      %1641 = vmatprep.subr.mxu0 %v1514
      %1642 = vmatpush1.msra.mxu0 %v1513
      %1643 = vmatprep.subr.mxu0 %v1516
      %1644 = vmatpush1.msra.mxu0 %v1515
      %1645 = vmatprep.subr.mxu0 %v1518
      %1646 = vmatpush1.msra.mxu0 %v1517
      %1647 = vmatprep.subr.mxu0 %v1520
      %1648 = vmatpush1.msra.mxu0 %v1519
      %1649 = vmatprep.subr.mxu0 %v1522
      %1650 = vmatpush1.msra.mxu0 %v1521
      %1651 = vmatprep.subr.mxu0 %v1524
      %1652 = vmatpush1.msra.mxu0 %v1523
      %1653 = vmatprep.subr.mxu0 %v1526
      %1654 = vmatpush1.msra.mxu0 %v1525
      %1655 = vmatprep.subr.mxu0 %v1528
      %1656 = vmatpush1.msra.mxu0 %v1527
      %1657 = vmatprep.subr.mxu0 %v1530
      %1658 = vmatpush1.msra.mxu0 %v1529
      %1659 = vmatprep.subr.mxu0 %v1532
      %1660 = vmatpush1.msra.mxu0 %v1531
      %1661 = vmatprep.subr.mxu0 %v1534
      %1662 = vmatpush1.msra.mxu0 %v1533
      %1663 = vmatprep.subr.mxu0 %v1552
      %1664 = vmatpush1.msra.mxu0 %v1549
      %1665 = vmatprep.subr.mxu0 0.0
      %1666 = vmatpush1.msra.mxu0 0.0
      %1667 = vmatprep.subr.mxu0 0.0
      %1668 = vmatpush1.msra.mxu0 0.0
      %1669 = vmatprep.subr.mxu0 0.0
      %1670 = vmatpush1.msra.mxu0 0.0
      %1671 = vmatprep.subr.mxu0 0.0
      %1672 = vmatpush1.msra.mxu0 0.0
      %1673 = vmatprep.subr.mxu0 0.0
      %1674 = vmatpush1.msra.mxu0 0.0
      %1675 = vmatprep.subr.mxu0 0.0
      %1676 = vmatpush1.msra.mxu0 0.0
      %1677 = vmatprep.subr.mxu0 0.0
      %1678 = vmatpush1.msra.mxu0 0.0
      %1679 = vmatprep.subr.mxu0 0.0
      %1680 = vmatpush1.msra.mxu0 0.0
      %1681 = vmatprep.subr.mxu0 0.0
      %1682 = vmatpush1.msra.mxu0 0.0
      %1683 = vmatprep.subr.mxu0 0.0
      %1684 = vmatpush1.msra.mxu0 0.0
      %1685 = vmatprep.subr.mxu0 0.0
      %1686 = vmatpush1.msra.mxu0 0.0
      %1687 = vmatprep.subr.mxu0 0.0
      %1688 = vmatpush1.msra.mxu0 0.0
      %1689 = vmatprep.mubr.f32.mxu0 %v1545
      %1690 = vmatmul.mubr.f32.gmra.mrb[0].mxu0 %v1427
      %v1691 = vpop.f32.mrb[0].mxu0
      %v1692 = vadd.f32 %v1621, %v1691
      %v1693 = vpop.f32.mrb[0].mxu0
      %v1694 = vadd.f32 %v1623, %v1693
      %1695 = vdwg.mxu0
      %v1696 = vmax.f32 %v1692, 0.0
      %v1697 = vmax.f32 %v1694, 0.0
      %1698 = vst [vmem:[%s305] sm:$0xff] %v1696
      %1699 = vst [vmem:[%s305 + $0x8] sm:$0xff] %v1697
      %p1700 = scmp.lt.s32.totalorder %s19, 1
      %s1701 = scalar_select %p1700, %s19, 1
      %s1702 = smul.addr %s1701, 2
      %s1703 = smul.addr %s1702, 8
      %s1704 = scalar_lea.vmem %s8, %s1703
      // Predicated region
      $region53: #{fdfe_net_forward.1} parent=51 // pred_check
        %p1705 = pneg %p210
      $region54: #{fdfe_net_forward.1} parent=51 // pred_check_branch
        %1707 = sbr.rel (%p1705) target = $region56
      $region55: #{fdfe_net_forward.1} parent=51 // pred_region
        _
      $region56: #{fdfe_net_forward.1} parent=51 // pred_fallthru
        _
    $region52: #{fdfe_net_forward.1} parent=5 // pred_fallthru
      _
    %p1708 = scmp.le.s32.totalorder 2, %s14
    // Predicated region
    $region57: #{fdfe_net_forward.1} parent=5 // pred_check
      %p1709 = pneg %p1708
    $region58: #{fdfe_net_forward.1} parent=5 // pred_check_branch
      %1711 = sbr.rel (%p1709) target = $region60
    $region59: #{fdfe_net_forward.1} parent=5 // pred_region
      %s1712 = ssub.s32 %s14, 2
      // Predicated region
      $region61: #{fdfe_net_forward.1} parent=59 // pred_check
        %p1713 = pneg %p216
      $region62: #{fdfe_net_forward.1} parent=59 // pred_check_branch
        %1715 = sbr.rel (%p1713) target = $region64
      $region63: #{fdfe_net_forward.1} parent=59 // pred_region
        %p1716 = scmp.lt.s32.totalorder %s20, 1
        %s1717 = scalar_select %p1716, %s20, 1
        %s1718 = smul.addr %s1717, 2
        %s1719 = smul.addr %s1718, 8
        %s1720 = scalar_lea.vmem %s8, %s1719
      $region64: #{fdfe_net_forward.1} parent=59 // pred_fallthru
        _
    $region60: #{fdfe_net_forward.1} parent=5 // pred_fallthru
      _
  $region6: #{fdfe_net_forward.1} parent=0 // loop_footer
    %s18 = sadd.s32 1, %s14
  $region7: #{fdfe_net_forward.1} parent=0 // loop_footer_branch
    %13 = sbr.rel target = $region3
  $region8: #{fdfe_net_forward.1} parent=0 // loop_exit
    _

</llo_original>
